<compile_context>
chip_gen: v5e
topology: v5e:2x2
jax: 0.10.0
libtpu: 0.0.40
codegen_flags: <defaults>
</compile_context>

<pallas_src>
import functools

import jax
import jax.numpy as jnp
from jax.experimental import pallas as pl
from jax.experimental.pallas import tpu as pltpu


def _round_up(x, m):
    return ((x + m - 1) // m) * m


def _skipgram_kernel(pos_u_ref, pos_v_ref, neg_v_ref,      # SMEM scalar-prefetch ids
                     u_tab, v_tab,                          # embedding tables (VMEM or HBM)
                     loss_ref,                              # (TB, 1) per-sample losses
                     u_buf, v_buf, neg_buf, sem,            # VMEM scratch + DMA sem
                     *, TB, K, tables_in_vmem):
    t = pl.program_id(0)
    base = t * TB

    if tables_in_vmem:
        # Fast path: tables are VMEM-resident; gather rows with dynamic loads
        # (no DMA descriptors, no HBM latency).
        for b in range(TB):
            pu = pos_u_ref[base + b]
            pv = pos_v_ref[base + b]
            u_buf[pl.ds(b, 1), :] = u_tab[pl.ds(pu, 1), :]
            v_buf[pl.ds(b, 1), :] = v_tab[pl.ds(pv, 1), :]
            for k in range(K):
                nk = neg_v_ref[(base + b) * K + k]
                neg_buf[k, pl.ds(b, 1), :] = v_tab[pl.ds(nk, 1), :]
    else:
        # Large-vocab path: tables stay in HBM.  Issue every row-gather DMA for
        # the whole tile before the first wait so their latencies overlap, and
        # share one DMA semaphore (equal number of starts and waits).
        copies = []
        for b in range(TB):
            pu = pos_u_ref[base + b]
            pv = pos_v_ref[base + b]
            copies.append(pltpu.make_async_copy(
                u_tab.at[pl.ds(pu, 1), :], u_buf.at[pl.ds(b, 1), :], sem.at[0]))
            copies.append(pltpu.make_async_copy(
                v_tab.at[pl.ds(pv, 1), :], v_buf.at[pl.ds(b, 1), :], sem.at[0]))
            for k in range(K):
                nk = neg_v_ref[(base + b) * K + k]
                copies.append(pltpu.make_async_copy(
                    v_tab.at[pl.ds(nk, 1), :],
                    neg_buf.at[k, pl.ds(b, 1), :],
                    sem.at[0]))
        for c in copies:
            c.start()
        for c in copies:
            c.wait()

    u = u_buf[...].astype(jnp.float32)          # (TB, D)
    v = v_buf[...].astype(jnp.float32)          # (TB, D)

    # positive term: -logsigmoid(clip(<u, v>, +/-10)) == log(1 + exp(-score))
    score = jnp.clip(jnp.sum(u * v, axis=-1, keepdims=True), -10.0, 10.0)   # (TB, 1)
    loss = jnp.log(1.0 + jnp.exp(-score))

    # negative terms: sum_k -logsigmoid(-clip(<neg_k, u>, +/-10)) == sum_k log(1+exp(s_k))
    for k in range(K):
        nk_rows = neg_buf[k].astype(jnp.float32)                            # (TB, D)
        ns = jnp.clip(jnp.sum(nk_rows * u, axis=-1, keepdims=True), -10.0, 10.0)
        loss = loss + jnp.log(1.0 + jnp.exp(ns))

    # TODO(synk): for very large TB (>=128) transpose to a lane-dense (1, TB)
    # output slab to avoid masked vst on the 1-wide last dim; negligible here.
    loss_ref[...] = loss                                                    # (TB, 1)


def skipgram_loss(pos_u, pos_v, neg_v, u_emb, v_emb, *,
                  tile_batch=None, table_vmem_budget_bytes=4 * 1024 * 1024):
    pos_u = jnp.asarray(pos_u)
    pos_v = jnp.asarray(pos_v)
    neg_v = jnp.asarray(neg_v)
    u_emb = jnp.asarray(u_emb)
    v_emb = jnp.asarray(v_emb)

    B = int(pos_u.shape[0])
    K = int(neg_v.shape[1])
    V, D = (int(s) for s in u_emb.shape)

    # Samples per grid step (multiple of 8).  Capped so the unrolled gather loop
    # stays small; per-step overhead amortized over TB samples.
    if tile_batch is None:
        tile_batch = min(32, _round_up(B, 8))
    TB = max(8, _round_up(int(tile_batch), 8))
    B_pad = _round_up(B, TB)
    num_tiles = B_pad // TB

    # Conservative cutover for the VMEM-resident-table fast path (leaves ample
    # headroom under the default scoped VMEM limit: 16 MiB v5e, 32 MiB v6e/v7x).
    tbl_bytes = (u_emb.size * u_emb.dtype.itemsize
                 + v_emb.size * v_emb.dtype.itemsize)
    tables_in_vmem = tbl_bytes <= table_vmem_budget_bytes

    # Pad ids to a multiple of TB with id 0 (valid row); padded losses are
    # dropped in the wrapper before the mean.
    pad = B_pad - B
    pu = jnp.pad(pos_u.reshape(-1).astype(jnp.int32), (0, pad))
    pv = jnp.pad(pos_v.reshape(-1).astype(jnp.int32), (0, pad))
    nv = jnp.pad(neg_v.astype(jnp.int32), ((0, pad), (0, 0))).reshape(-1)

    if tables_in_vmem:
        table_specs = [pl.BlockSpec((V, D), lambda i, *_: (0, 0)),
                       pl.BlockSpec((V, D), lambda i, *_: (0, 0))]
    else:
        table_specs = [pl.BlockSpec(memory_space=pl.ANY),
                       pl.BlockSpec(memory_space=pl.ANY)]

    grid_spec = pltpu.PrefetchScalarGridSpec(
        num_scalar_prefetch=3,                 # pos_u, pos_v, neg_v -> SMEM
        grid=(num_tiles,),
        in_specs=table_specs,
        out_specs=pl.BlockSpec((TB, 1), lambda i, *_: (i, 0)),
        scratch_shapes=[
            pltpu.VMEM((TB, D), u_emb.dtype),        # gathered u rows
            pltpu.VMEM((TB, D), v_emb.dtype),        # gathered v rows
            pltpu.VMEM((K, TB, D), v_emb.dtype),     # gathered negative rows
            pltpu.SemaphoreType.DMA((1,)),           # shared DMA semaphore
        ],
    )

    itemsize = max(u_emb.dtype.itemsize, v_emb.dtype.itemsize)
    cost = pl.CostEstimate(
        flops=2 * B_pad * (K + 1) * D,
        transcendentals=2 * B_pad * (K + 1),
        bytes_accessed=B_pad * (K + 2) * D * itemsize + B_pad * (K + 2) * 4 + B_pad * 4,
    )

    kernel = functools.partial(_skipgram_kernel, TB=TB, K=K,
                               tables_in_vmem=tables_in_vmem)

    per_sample = pl.pallas_call(
        kernel,
        out_shape=jax.ShapeDtypeStruct((B_pad, 1), jnp.float32),
        grid_spec=grid_spec,
        compiler_params=pltpu.CompilerParams(
            # Only buys throughput on multi-TC parts (v7x); harmless elsewhere.
            dimension_semantics=("parallel",)),
        cost_estimate=cost,
    )(pu, pv, nv, u_emb, v_emb)

    return jnp.mean(per_sample[:B, 0])


def skipgram_loss_ref(pos_u, pos_v, neg_v, u_emb, v_emb):
    # Pure-JAX reference of the PyTorch forward (correctness check).
    emb_u = u_emb[pos_u]                    # (B, D)
    emb_v = v_emb[pos_v]                    # (B, D)
    emb_neg = v_emb[neg_v]                  # (B, K, D)
    score = jnp.clip(jnp.sum(emb_u * emb_v, axis=1), -10.0, 10.0)
    score = -jax.nn.log_sigmoid(score)
    neg_score = jnp.einsum('bkd,bd->bk', emb_neg, emb_u)
    neg_score = jnp.clip(neg_score, -10.0, 10.0)
    neg_score = -jnp.sum(jax.nn.log_sigmoid(-neg_score), axis=1)
    return jnp.mean(score + neg_score)


if __name__ == "__main__":
    # Module hyperparameters (small, consistent with SkipGramModel.__init__).
    emb_size = 64        # vocabulary size V
    emb_dimension = 32   # embedding dim D
    B = 8                # batch size
    K = 5                # negative samples per positive

    key = jax.random.PRNGKey(0)
    k_u, k_v, k_pu, k_pv, k_nv = jax.random.split(key, 5)

    # Parameter init exactly as in SkipGramModel.__init__:
    #   u_embeddings ~ U(-1/D, 1/D), v_embeddings = 0
    initrange = 1.0 / emb_dimension
    u_emb = jax.random.uniform(k_u, (emb_size, emb_dimension),
                               minval=-initrange, maxval=initrange,
                               dtype=jnp.float32)
    v_emb_zero = jnp.zeros((emb_size, emb_dimension), dtype=jnp.float32)
    v_emb_rand = jax.random.uniform(k_v, (emb_size, emb_dimension),
                                    minval=-initrange, maxval=initrange,
                                    dtype=jnp.float32)

    # Example inputs: word indices.
    pos_u = jax.random.randint(k_pu, (B,), 0, emb_size, dtype=jnp.int32)
    pos_v = jax.random.randint(k_pv, (B,), 0, emb_size, dtype=jnp.int32)
    neg_v = jax.random.randint(k_nv, (B, K), 0, emb_size, dtype=jnp.int32)

    # Check 1: module-faithful init (v_embeddings = 0), VMEM-table fast path.
    out0 = jax.block_until_ready(skipgram_loss(pos_u, pos_v, neg_v, u_emb, v_emb_zero))
    ref0 = jax.block_until_ready(skipgram_loss_ref(pos_u, pos_v, neg_v, u_emb, v_emb_zero))
    assert jnp.allclose(out0, ref0, rtol=1e-5, atol=1e-5), (out0, ref0)

    # Check 2: non-zero v_embeddings (as after training), VMEM-table fast path.
    out1 = jax.block_until_ready(skipgram_loss(pos_u, pos_v, neg_v, u_emb, v_emb_rand))
    ref1 = jax.block_until_ready(skipgram_loss_ref(pos_u, pos_v, neg_v, u_emb, v_emb_rand))
    assert jnp.allclose(out1, ref1, rtol=1e-5, atol=1e-5), (out1, ref1)

    # Check 3: force the HBM-resident-table batched-DMA path (large-vocab path).
    out2 = jax.block_until_ready(
        skipgram_loss(pos_u, pos_v, neg_v, u_emb, v_emb_rand,
                      table_vmem_budget_bytes=0))
    assert jnp.allclose(out2, ref1, rtol=1e-5, atol=1e-5), (out2, ref1)

    print("KERNEL_OK")
</pallas_src>

<mosaic_0001>
module attributes {stable_mosaic.version = 11 : i64} {
  func.func @_skipgram_kernel(%arg0: i32, %arg1: memref<8xi32, #tpu.memory_space<smem>>, %arg2: memref<8xi32, #tpu.memory_space<smem>>, %arg3: memref<40xi32, #tpu.memory_space<smem>>, %arg4: memref<64x32xf32, #tpu.memory_space<vmem>>, %arg5: memref<64x32xf32, #tpu.memory_space<vmem>>, %arg6: memref<8x1xf32, #tpu.memory_space<vmem>>, %arg7: memref<8x32xf32, #tpu.memory_space<vmem>>, %arg8: memref<8x32xf32, #tpu.memory_space<vmem>>, %arg9: memref<5x8x32xf32, #tpu.memory_space<vmem>>, %arg10: memref<1x!tpu.dma_semaphore, #tpu.memory_space<semaphore_mem>>) attributes {dimension_semantics = [#tpu.dimension_semantics<parallel>], iteration_bounds = array<i64: 1>, scalar_prefetch = 3 : i64, scratch_operands = 4 : i64, tpu.core_type = #tpu.core_type<tc>, window_params = [{pipeline_mode = #tpu.pipeline_mode<synchronous>, transform_indices = @transform_0, window_bounds = array<i64: 64, 32>}, {pipeline_mode = #tpu.pipeline_mode<synchronous>, transform_indices = @transform_1, window_bounds = array<i64: 64, 32>}, {transform_indices = @transform_2, window_bounds = array<i64: 8, 1>}]} {
    %c8_i32 = arith.constant 8 : i32
    %0 = arith.muli %arg0, %c8_i32 : i32
    %c0_i32 = arith.constant 0 : i32
    %1 = arith.addi %0, %c0_i32 : i32
    %2 = arith.index_cast %1 : i32 to index
    %3 = memref.load %arg1[%2] : memref<8xi32, #tpu.memory_space<smem>>
    %c0_i32_0 = arith.constant 0 : i32
    %4 = arith.addi %0, %c0_i32_0 : i32
    %5 = arith.index_cast %4 : i32 to index
    %6 = memref.load %arg2[%5] : memref<8xi32, #tpu.memory_space<smem>>
    %7 = arith.index_cast %3 : i32 to index
    %c0 = arith.constant 0 : index
    %8 = vector.load %arg4[%7, %c0] : memref<64x32xf32, #tpu.memory_space<vmem>>, vector<1x32xf32>
    %c0_1 = arith.constant 0 : index
    %c0_2 = arith.constant 0 : index
    %9 = vector.load %arg7[%c0_1, %c0_2] : memref<8x32xf32, #tpu.memory_space<vmem>>, vector<1x32xf32>
    tpu.vector_store %arg7[%c0_1, %c0_2], %8 {strides = array<i32>} : memref<8x32xf32, #tpu.memory_space<vmem>>, vector<1x32xf32>,
    %10 = arith.index_cast %6 : i32 to index
    %c0_3 = arith.constant 0 : index
    %11 = vector.load %arg5[%10, %c0_3] : memref<64x32xf32, #tpu.memory_space<vmem>>, vector<1x32xf32>
    %c0_4 = arith.constant 0 : index
    %c0_5 = arith.constant 0 : index
    %12 = vector.load %arg8[%c0_4, %c0_5] : memref<8x32xf32, #tpu.memory_space<vmem>>, vector<1x32xf32>
    tpu.vector_store %arg8[%c0_4, %c0_5], %11 {strides = array<i32>} : memref<8x32xf32, #tpu.memory_space<vmem>>, vector<1x32xf32>,
    %c0_i32_6 = arith.constant 0 : i32
    %13 = arith.addi %0, %c0_i32_6 : i32
    %c5_i32 = arith.constant 5 : i32
    %14 = arith.muli %13, %c5_i32 : i32
    %c0_i32_7 = arith.constant 0 : i32
    %15 = arith.addi %14, %c0_i32_7 : i32
    %16 = arith.index_cast %15 : i32 to index
    %17 = memref.load %arg3[%16] : memref<40xi32, #tpu.memory_space<smem>>
    %18 = arith.index_cast %17 : i32 to index
    %c0_8 = arith.constant 0 : index
    %19 = vector.load %arg5[%18, %c0_8] : memref<64x32xf32, #tpu.memory_space<vmem>>, vector<1x32xf32>
    %c0_9 = arith.constant 0 : index
    %c0_10 = arith.constant 0 : index
    %c0_11 = arith.constant 0 : index
    %20 = vector.load %arg9[%c0_9, %c0_10, %c0_11] : memref<5x8x32xf32, #tpu.memory_space<vmem>>, vector<1x1x32xf32>
    %21 = vector.shape_cast %20 : vector<1x1x32xf32> to vector<1x32xf32>
    %22 = vector.shape_cast %19 : vector<1x32xf32> to vector<1x1x32xf32>
    tpu.vector_store %arg9[%c0_9, %c0_10, %c0_11], %22 {strides = array<i32>} : memref<5x8x32xf32, #tpu.memory_space<vmem>>, vector<1x1x32xf32>,
    %c0_i32_12 = arith.constant 0 : i32
    %23 = arith.addi %0, %c0_i32_12 : i32
    %c5_i32_13 = arith.constant 5 : i32
    %24 = arith.muli %23, %c5_i32_13 : i32
    %c1_i32 = arith.constant 1 : i32
    %25 = arith.addi %24, %c1_i32 : i32
    %26 = arith.index_cast %25 : i32 to index
    %27 = memref.load %arg3[%26] : memref<40xi32, #tpu.memory_space<smem>>
    %28 = arith.index_cast %27 : i32 to index
    %c0_14 = arith.constant 0 : index
    %29 = vector.load %arg5[%28, %c0_14] : memref<64x32xf32, #tpu.memory_space<vmem>>, vector<1x32xf32>
    %c1 = arith.constant 1 : index
    %c0_15 = arith.constant 0 : index
    %c0_16 = arith.constant 0 : index
    %30 = vector.load %arg9[%c1, %c0_15, %c0_16] : memref<5x8x32xf32, #tpu.memory_space<vmem>>, vector<1x1x32xf32>
    %31 = vector.shape_cast %30 : vector<1x1x32xf32> to vector<1x32xf32>
    %32 = vector.shape_cast %29 : vector<1x32xf32> to vector<1x1x32xf32>
    tpu.vector_store %arg9[%c1, %c0_15, %c0_16], %32 {strides = array<i32>} : memref<5x8x32xf32, #tpu.memory_space<vmem>>, vector<1x1x32xf32>,
    %c0_i32_17 = arith.constant 0 : i32
    %33 = arith.addi %0, %c0_i32_17 : i32
    %c5_i32_18 = arith.constant 5 : i32
    %34 = arith.muli %33, %c5_i32_18 : i32
    %c2_i32 = arith.constant 2 : i32
    %35 = arith.addi %34, %c2_i32 : i32
    %36 = arith.index_cast %35 : i32 to index
    %37 = memref.load %arg3[%36] : memref<40xi32, #tpu.memory_space<smem>>
    %38 = arith.index_cast %37 : i32 to index
    %c0_19 = arith.constant 0 : index
    %39 = vector.load %arg5[%38, %c0_19] : memref<64x32xf32, #tpu.memory_space<vmem>>, vector<1x32xf32>
    %c2 = arith.constant 2 : index
    %c0_20 = arith.constant 0 : index
    %c0_21 = arith.constant 0 : index
    %40 = vector.load %arg9[%c2, %c0_20, %c0_21] : memref<5x8x32xf32, #tpu.memory_space<vmem>>, vector<1x1x32xf32>
    %41 = vector.shape_cast %40 : vector<1x1x32xf32> to vector<1x32xf32>
    %42 = vector.shape_cast %39 : vector<1x32xf32> to vector<1x1x32xf32>
    tpu.vector_store %arg9[%c2, %c0_20, %c0_21], %42 {strides = array<i32>} : memref<5x8x32xf32, #tpu.memory_space<vmem>>, vector<1x1x32xf32>,
    %c0_i32_22 = arith.constant 0 : i32
    %43 = arith.addi %0, %c0_i32_22 : i32
    %c5_i32_23 = arith.constant 5 : i32
    %44 = arith.muli %43, %c5_i32_23 : i32
    %c3_i32 = arith.constant 3 : i32
    %45 = arith.addi %44, %c3_i32 : i32
    %46 = arith.index_cast %45 : i32 to index
    %47 = memref.load %arg3[%46] : memref<40xi32, #tpu.memory_space<smem>>
    %48 = arith.index_cast %47 : i32 to index
    %c0_24 = arith.constant 0 : index
    %49 = vector.load %arg5[%48, %c0_24] : memref<64x32xf32, #tpu.memory_space<vmem>>, vector<1x32xf32>
    %c3 = arith.constant 3 : index
    %c0_25 = arith.constant 0 : index
    %c0_26 = arith.constant 0 : index
    %50 = vector.load %arg9[%c3, %c0_25, %c0_26] : memref<5x8x32xf32, #tpu.memory_space<vmem>>, vector<1x1x32xf32>
    %51 = vector.shape_cast %50 : vector<1x1x32xf32> to vector<1x32xf32>
    %52 = vector.shape_cast %49 : vector<1x32xf32> to vector<1x1x32xf32>
    tpu.vector_store %arg9[%c3, %c0_25, %c0_26], %52 {strides = array<i32>} : memref<5x8x32xf32, #tpu.memory_space<vmem>>, vector<1x1x32xf32>,
    %c0_i32_27 = arith.constant 0 : i32
    %53 = arith.addi %0, %c0_i32_27 : i32
    %c5_i32_28 = arith.constant 5 : i32
    %54 = arith.muli %53, %c5_i32_28 : i32
    %c4_i32 = arith.constant 4 : i32
    %55 = arith.addi %54, %c4_i32 : i32
    %56 = arith.index_cast %55 : i32 to index
    %57 = memref.load %arg3[%56] : memref<40xi32, #tpu.memory_space<smem>>
    %58 = arith.index_cast %57 : i32 to index
    %c0_29 = arith.constant 0 : index
    %59 = vector.load %arg5[%58, %c0_29] : memref<64x32xf32, #tpu.memory_space<vmem>>, vector<1x32xf32>
    %c4 = arith.constant 4 : index
    %c0_30 = arith.constant 0 : index
    %c0_31 = arith.constant 0 : index
    %60 = vector.load %arg9[%c4, %c0_30, %c0_31] : memref<5x8x32xf32, #tpu.memory_space<vmem>>, vector<1x1x32xf32>
    %61 = vector.shape_cast %60 : vector<1x1x32xf32> to vector<1x32xf32>
    %62 = vector.shape_cast %59 : vector<1x32xf32> to vector<1x1x32xf32>
    tpu.vector_store %arg9[%c4, %c0_30, %c0_31], %62 {strides = array<i32>} : memref<5x8x32xf32, #tpu.memory_space<vmem>>, vector<1x1x32xf32>,
    %c1_i32_32 = arith.constant 1 : i32
    %63 = arith.addi %0, %c1_i32_32 : i32
    %64 = arith.index_cast %63 : i32 to index
    %65 = memref.load %arg1[%64] : memref<8xi32, #tpu.memory_space<smem>>
    %c1_i32_33 = arith.constant 1 : i32
    %66 = arith.addi %0, %c1_i32_33 : i32
    %67 = arith.index_cast %66 : i32 to index
    %68 = memref.load %arg2[%67] : memref<8xi32, #tpu.memory_space<smem>>
    %69 = arith.index_cast %65 : i32 to index
    %c0_34 = arith.constant 0 : index
    %70 = vector.load %arg4[%69, %c0_34] : memref<64x32xf32, #tpu.memory_space<vmem>>, vector<1x32xf32>
    %c1_35 = arith.constant 1 : index
    %c0_36 = arith.constant 0 : index
    %71 = vector.load %arg7[%c1_35, %c0_36] : memref<8x32xf32, #tpu.memory_space<vmem>>, vector<1x32xf32>
    tpu.vector_store %arg7[%c1_35, %c0_36], %70 {strides = array<i32>} : memref<8x32xf32, #tpu.memory_space<vmem>>, vector<1x32xf32>,
    %72 = arith.index_cast %68 : i32 to index
    %c0_37 = arith.constant 0 : index
    %73 = vector.load %arg5[%72, %c0_37] : memref<64x32xf32, #tpu.memory_space<vmem>>, vector<1x32xf32>
    %c1_38 = arith.constant 1 : index
    %c0_39 = arith.constant 0 : index
    %74 = vector.load %arg8[%c1_38, %c0_39] : memref<8x32xf32, #tpu.memory_space<vmem>>, vector<1x32xf32>
    tpu.vector_store %arg8[%c1_38, %c0_39], %73 {strides = array<i32>} : memref<8x32xf32, #tpu.memory_space<vmem>>, vector<1x32xf32>,
    %c1_i32_40 = arith.constant 1 : i32
    %75 = arith.addi %0, %c1_i32_40 : i32
    %c5_i32_41 = arith.constant 5 : i32
    %76 = arith.muli %75, %c5_i32_41 : i32
    %c0_i32_42 = arith.constant 0 : i32
    %77 = arith.addi %76, %c0_i32_42 : i32
    %78 = arith.index_cast %77 : i32 to index
    %79 = memref.load %arg3[%78] : memref<40xi32, #tpu.memory_space<smem>>
    %80 = arith.index_cast %79 : i32 to index
    %c0_43 = arith.constant 0 : index
    %81 = vector.load %arg5[%80, %c0_43] : memref<64x32xf32, #tpu.memory_space<vmem>>, vector<1x32xf32>
    %c0_44 = arith.constant 0 : index
    %c1_45 = arith.constant 1 : index
    %c0_46 = arith.constant 0 : index
    %82 = vector.load %arg9[%c0_44, %c1_45, %c0_46] : memref<5x8x32xf32, #tpu.memory_space<vmem>>, vector<1x1x32xf32>
    %83 = vector.shape_cast %82 : vector<1x1x32xf32> to vector<1x32xf32>
    %84 = vector.shape_cast %81 : vector<1x32xf32> to vector<1x1x32xf32>
    tpu.vector_store %arg9[%c0_44, %c1_45, %c0_46], %84 {strides = array<i32>} : memref<5x8x32xf32, #tpu.memory_space<vmem>>, vector<1x1x32xf32>,
    %c1_i32_47 = arith.constant 1 : i32
    %85 = arith.addi %0, %c1_i32_47 : i32
    %c5_i32_48 = arith.constant 5 : i32
    %86 = arith.muli %85, %c5_i32_48 : i32
    %c1_i32_49 = arith.constant 1 : i32
    %87 = arith.addi %86, %c1_i32_49 : i32
    %88 = arith.index_cast %87 : i32 to index
    %89 = memref.load %arg3[%88] : memref<40xi32, #tpu.memory_space<smem>>
    %90 = arith.index_cast %89 : i32 to index
    %c0_50 = arith.constant 0 : index
    %91 = vector.load %arg5[%90, %c0_50] : memref<64x32xf32, #tpu.memory_space<vmem>>, vector<1x32xf32>
    %c1_51 = arith.constant 1 : index
    %c1_52 = arith.constant 1 : index
    %c0_53 = arith.constant 0 : index
    %92 = vector.load %arg9[%c1_51, %c1_52, %c0_53] : memref<5x8x32xf32, #tpu.memory_space<vmem>>, vector<1x1x32xf32>
    %93 = vector.shape_cast %92 : vector<1x1x32xf32> to vector<1x32xf32>
    %94 = vector.shape_cast %91 : vector<1x32xf32> to vector<1x1x32xf32>
    tpu.vector_store %arg9[%c1_51, %c1_52, %c0_53], %94 {strides = array<i32>} : memref<5x8x32xf32, #tpu.memory_space<vmem>>, vector<1x1x32xf32>,
    %c1_i32_54 = arith.constant 1 : i32
    %95 = arith.addi %0, %c1_i32_54 : i32
    %c5_i32_55 = arith.constant 5 : i32
    %96 = arith.muli %95, %c5_i32_55 : i32
    %c2_i32_56 = arith.constant 2 : i32
    %97 = arith.addi %96, %c2_i32_56 : i32
    %98 = arith.index_cast %97 : i32 to index
    %99 = memref.load %arg3[%98] : memref<40xi32, #tpu.memory_space<smem>>
    %100 = arith.index_cast %99 : i32 to index
    %c0_57 = arith.constant 0 : index
    %101 = vector.load %arg5[%100, %c0_57] : memref<64x32xf32, #tpu.memory_space<vmem>>, vector<1x32xf32>
    %c2_58 = arith.constant 2 : index
    %c1_59 = arith.constant 1 : index
    %c0_60 = arith.constant 0 : index
    %102 = vector.load %arg9[%c2_58, %c1_59, %c0_60] : memref<5x8x32xf32, #tpu.memory_space<vmem>>, vector<1x1x32xf32>
    %103 = vector.shape_cast %102 : vector<1x1x32xf32> to vector<1x32xf32>
    %104 = vector.shape_cast %101 : vector<1x32xf32> to vector<1x1x32xf32>
    tpu.vector_store %arg9[%c2_58, %c1_59, %c0_60], %104 {strides = array<i32>} : memref<5x8x32xf32, #tpu.memory_space<vmem>>, vector<1x1x32xf32>,
    %c1_i32_61 = arith.constant 1 : i32
    %105 = arith.addi %0, %c1_i32_61 : i32
    %c5_i32_62 = arith.constant 5 : i32
    %106 = arith.muli %105, %c5_i32_62 : i32
    %c3_i32_63 = arith.constant 3 : i32
    %107 = arith.addi %106, %c3_i32_63 : i32
    %108 = arith.index_cast %107 : i32 to index
    %109 = memref.load %arg3[%108] : memref<40xi32, #tpu.memory_space<smem>>
    %110 = arith.index_cast %109 : i32 to index
    %c0_64 = arith.constant 0 : index
    %111 = vector.load %arg5[%110, %c0_64] : memref<64x32xf32, #tpu.memory_space<vmem>>, vector<1x32xf32>
    %c3_65 = arith.constant 3 : index
    %c1_66 = arith.constant 1 : index
    %c0_67 = arith.constant 0 : index
    %112 = vector.load %arg9[%c3_65, %c1_66, %c0_67] : memref<5x8x32xf32, #tpu.memory_space<vmem>>, vector<1x1x32xf32>
    %113 = vector.shape_cast %112 : vector<1x1x32xf32> to vector<1x32xf32>
    %114 = vector.shape_cast %111 : vector<1x32xf32> to vector<1x1x32xf32>
    tpu.vector_store %arg9[%c3_65, %c1_66, %c0_67], %114 {strides = array<i32>} : memref<5x8x32xf32, #tpu.memory_space<vmem>>, vector<1x1x32xf32>,
    %c1_i32_68 = arith.constant 1 : i32
    %115 = arith.addi %0, %c1_i32_68 : i32
    %c5_i32_69 = arith.constant 5 : i32
    %116 = arith.muli %115, %c5_i32_69 : i32
    %c4_i32_70 = arith.constant 4 : i32
    %117 = arith.addi %116, %c4_i32_70 : i32
    %118 = arith.index_cast %117 : i32 to index
    %119 = memref.load %arg3[%118] : memref<40xi32, #tpu.memory_space<smem>>
    %120 = arith.index_cast %119 : i32 to index
    %c0_71 = arith.constant 0 : index
    %121 = vector.load %arg5[%120, %c0_71] : memref<64x32xf32, #tpu.memory_space<vmem>>, vector<1x32xf32>
    %c4_72 = arith.constant 4 : index
    %c1_73 = arith.constant 1 : index
    %c0_74 = arith.constant 0 : index
    %122 = vector.load %arg9[%c4_72, %c1_73, %c0_74] : memref<5x8x32xf32, #tpu.memory_space<vmem>>, vector<1x1x32xf32>
    %123 = vector.shape_cast %122 : vector<1x1x32xf32> to vector<1x32xf32>
    %124 = vector.shape_cast %121 : vector<1x32xf32> to vector<1x1x32xf32>
    tpu.vector_store %arg9[%c4_72, %c1_73, %c0_74], %124 {strides = array<i32>} : memref<5x8x32xf32, #tpu.memory_space<vmem>>, vector<1x1x32xf32>,
    %c2_i32_75 = arith.constant 2 : i32
    %125 = arith.addi %0, %c2_i32_75 : i32
    %126 = arith.index_cast %125 : i32 to index
    %127 = memref.load %arg1[%126] : memref<8xi32, #tpu.memory_space<smem>>
    %c2_i32_76 = arith.constant 2 : i32
    %128 = arith.addi %0, %c2_i32_76 : i32
    %129 = arith.index_cast %128 : i32 to index
    %130 = memref.load %arg2[%129] : memref<8xi32, #tpu.memory_space<smem>>
    %131 = arith.index_cast %127 : i32 to index
    %c0_77 = arith.constant 0 : index
    %132 = vector.load %arg4[%131, %c0_77] : memref<64x32xf32, #tpu.memory_space<vmem>>, vector<1x32xf32>
    %c2_78 = arith.constant 2 : index
    %c0_79 = arith.constant 0 : index
    %133 = vector.load %arg7[%c2_78, %c0_79] : memref<8x32xf32, #tpu.memory_space<vmem>>, vector<1x32xf32>
    tpu.vector_store %arg7[%c2_78, %c0_79], %132 {strides = array<i32>} : memref<8x32xf32, #tpu.memory_space<vmem>>, vector<1x32xf32>,
    %134 = arith.index_cast %130 : i32 to index
    %c0_80 = arith.constant 0 : index
    %135 = vector.load %arg5[%134, %c0_80] : memref<64x32xf32, #tpu.memory_space<vmem>>, vector<1x32xf32>
    %c2_81 = arith.constant 2 : index
    %c0_82 = arith.constant 0 : index
    %136 = vector.load %arg8[%c2_81, %c0_82] : memref<8x32xf32, #tpu.memory_space<vmem>>, vector<1x32xf32>
    tpu.vector_store %arg8[%c2_81, %c0_82], %135 {strides = array<i32>} : memref<8x32xf32, #tpu.memory_space<vmem>>, vector<1x32xf32>,
    %c2_i32_83 = arith.constant 2 : i32
    %137 = arith.addi %0, %c2_i32_83 : i32
    %c5_i32_84 = arith.constant 5 : i32
    %138 = arith.muli %137, %c5_i32_84 : i32
    %c0_i32_85 = arith.constant 0 : i32
    %139 = arith.addi %138, %c0_i32_85 : i32
    %140 = arith.index_cast %139 : i32 to index
    %141 = memref.load %arg3[%140] : memref<40xi32, #tpu.memory_space<smem>>
    %142 = arith.index_cast %141 : i32 to index
    %c0_86 = arith.constant 0 : index
    %143 = vector.load %arg5[%142, %c0_86] : memref<64x32xf32, #tpu.memory_space<vmem>>, vector<1x32xf32>
    %c0_87 = arith.constant 0 : index
    %c2_88 = arith.constant 2 : index
    %c0_89 = arith.constant 0 : index
    %144 = vector.load %arg9[%c0_87, %c2_88, %c0_89] : memref<5x8x32xf32, #tpu.memory_space<vmem>>, vector<1x1x32xf32>
    %145 = vector.shape_cast %144 : vector<1x1x32xf32> to vector<1x32xf32>
    %146 = vector.shape_cast %143 : vector<1x32xf32> to vector<1x1x32xf32>
    tpu.vector_store %arg9[%c0_87, %c2_88, %c0_89], %146 {strides = array<i32>} : memref<5x8x32xf32, #tpu.memory_space<vmem>>, vector<1x1x32xf32>,
    %c2_i32_90 = arith.constant 2 : i32
    %147 = arith.addi %0, %c2_i32_90 : i32
    %c5_i32_91 = arith.constant 5 : i32
    %148 = arith.muli %147, %c5_i32_91 : i32
    %c1_i32_92 = arith.constant 1 : i32
    %149 = arith.addi %148, %c1_i32_92 : i32
    %150 = arith.index_cast %149 : i32 to index
    %151 = memref.load %arg3[%150] : memref<40xi32, #tpu.memory_space<smem>>
    %152 = arith.index_cast %151 : i32 to index
    %c0_93 = arith.constant 0 : index
    %153 = vector.load %arg5[%152, %c0_93] : memref<64x32xf32, #tpu.memory_space<vmem>>, vector<1x32xf32>
    %c1_94 = arith.constant 1 : index
    %c2_95 = arith.constant 2 : index
    %c0_96 = arith.constant 0 : index
    %154 = vector.load %arg9[%c1_94, %c2_95, %c0_96] : memref<5x8x32xf32, #tpu.memory_space<vmem>>, vector<1x1x32xf32>
    %155 = vector.shape_cast %154 : vector<1x1x32xf32> to vector<1x32xf32>
    %156 = vector.shape_cast %153 : vector<1x32xf32> to vector<1x1x32xf32>
    tpu.vector_store %arg9[%c1_94, %c2_95, %c0_96], %156 {strides = array<i32>} : memref<5x8x32xf32, #tpu.memory_space<vmem>>, vector<1x1x32xf32>,
    %c2_i32_97 = arith.constant 2 : i32
    %157 = arith.addi %0, %c2_i32_97 : i32
    %c5_i32_98 = arith.constant 5 : i32
    %158 = arith.muli %157, %c5_i32_98 : i32
    %c2_i32_99 = arith.constant 2 : i32
    %159 = arith.addi %158, %c2_i32_99 : i32
    %160 = arith.index_cast %159 : i32 to index
    %161 = memref.load %arg3[%160] : memref<40xi32, #tpu.memory_space<smem>>
    %162 = arith.index_cast %161 : i32 to index
    %c0_100 = arith.constant 0 : index
    %163 = vector.load %arg5[%162, %c0_100] : memref<64x32xf32, #tpu.memory_space<vmem>>, vector<1x32xf32>
    %c2_101 = arith.constant 2 : index
    %c2_102 = arith.constant 2 : index
    %c0_103 = arith.constant 0 : index
    %164 = vector.load %arg9[%c2_101, %c2_102, %c0_103] : memref<5x8x32xf32, #tpu.memory_space<vmem>>, vector<1x1x32xf32>
    %165 = vector.shape_cast %164 : vector<1x1x32xf32> to vector<1x32xf32>
    %166 = vector.shape_cast %163 : vector<1x32xf32> to vector<1x1x32xf32>
    tpu.vector_store %arg9[%c2_101, %c2_102, %c0_103], %166 {strides = array<i32>} : memref<5x8x32xf32, #tpu.memory_space<vmem>>, vector<1x1x32xf32>,
    %c2_i32_104 = arith.constant 2 : i32
    %167 = arith.addi %0, %c2_i32_104 : i32
    %c5_i32_105 = arith.constant 5 : i32
    %168 = arith.muli %167, %c5_i32_105 : i32
    %c3_i32_106 = arith.constant 3 : i32
    %169 = arith.addi %168, %c3_i32_106 : i32
    %170 = arith.index_cast %169 : i32 to index
    %171 = memref.load %arg3[%170] : memref<40xi32, #tpu.memory_space<smem>>
    %172 = arith.index_cast %171 : i32 to index
    %c0_107 = arith.constant 0 : index
    %173 = vector.load %arg5[%172, %c0_107] : memref<64x32xf32, #tpu.memory_space<vmem>>, vector<1x32xf32>
    %c3_108 = arith.constant 3 : index
    %c2_109 = arith.constant 2 : index
    %c0_110 = arith.constant 0 : index
    %174 = vector.load %arg9[%c3_108, %c2_109, %c0_110] : memref<5x8x32xf32, #tpu.memory_space<vmem>>, vector<1x1x32xf32>
    %175 = vector.shape_cast %174 : vector<1x1x32xf32> to vector<1x32xf32>
    %176 = vector.shape_cast %173 : vector<1x32xf32> to vector<1x1x32xf32>
    tpu.vector_store %arg9[%c3_108, %c2_109, %c0_110], %176 {strides = array<i32>} : memref<5x8x32xf32, #tpu.memory_space<vmem>>, vector<1x1x32xf32>,
    %c2_i32_111 = arith.constant 2 : i32
    %177 = arith.addi %0, %c2_i32_111 : i32
    %c5_i32_112 = arith.constant 5 : i32
    %178 = arith.muli %177, %c5_i32_112 : i32
    %c4_i32_113 = arith.constant 4 : i32
    %179 = arith.addi %178, %c4_i32_113 : i32
    %180 = arith.index_cast %179 : i32 to index
    %181 = memref.load %arg3[%180] : memref<40xi32, #tpu.memory_space<smem>>
    %182 = arith.index_cast %181 : i32 to index
    %c0_114 = arith.constant 0 : index
    %183 = vector.load %arg5[%182, %c0_114] : memref<64x32xf32, #tpu.memory_space<vmem>>, vector<1x32xf32>
    %c4_115 = arith.constant 4 : index
    %c2_116 = arith.constant 2 : index
    %c0_117 = arith.constant 0 : index
    %184 = vector.load %arg9[%c4_115, %c2_116, %c0_117] : memref<5x8x32xf32, #tpu.memory_space<vmem>>, vector<1x1x32xf32>
    %185 = vector.shape_cast %184 : vector<1x1x32xf32> to vector<1x32xf32>
    %186 = vector.shape_cast %183 : vector<1x32xf32> to vector<1x1x32xf32>
    tpu.vector_store %arg9[%c4_115, %c2_116, %c0_117], %186 {strides = array<i32>} : memref<5x8x32xf32, #tpu.memory_space<vmem>>, vector<1x1x32xf32>,
    %c3_i32_118 = arith.constant 3 : i32
    %187 = arith.addi %0, %c3_i32_118 : i32
    %188 = arith.index_cast %187 : i32 to index
    %189 = memref.load %arg1[%188] : memref<8xi32, #tpu.memory_space<smem>>
    %c3_i32_119 = arith.constant 3 : i32
    %190 = arith.addi %0, %c3_i32_119 : i32
    %191 = arith.index_cast %190 : i32 to index
    %192 = memref.load %arg2[%191] : memref<8xi32, #tpu.memory_space<smem>>
    %193 = arith.index_cast %189 : i32 to index
    %c0_120 = arith.constant 0 : index
    %194 = vector.load %arg4[%193, %c0_120] : memref<64x32xf32, #tpu.memory_space<vmem>>, vector<1x32xf32>
    %c3_121 = arith.constant 3 : index
    %c0_122 = arith.constant 0 : index
    %195 = vector.load %arg7[%c3_121, %c0_122] : memref<8x32xf32, #tpu.memory_space<vmem>>, vector<1x32xf32>
    tpu.vector_store %arg7[%c3_121, %c0_122], %194 {strides = array<i32>} : memref<8x32xf32, #tpu.memory_space<vmem>>, vector<1x32xf32>,
    %196 = arith.index_cast %192 : i32 to index
    %c0_123 = arith.constant 0 : index
    %197 = vector.load %arg5[%196, %c0_123] : memref<64x32xf32, #tpu.memory_space<vmem>>, vector<1x32xf32>
    %c3_124 = arith.constant 3 : index
    %c0_125 = arith.constant 0 : index
    %198 = vector.load %arg8[%c3_124, %c0_125] : memref<8x32xf32, #tpu.memory_space<vmem>>, vector<1x32xf32>
    tpu.vector_store %arg8[%c3_124, %c0_125], %197 {strides = array<i32>} : memref<8x32xf32, #tpu.memory_space<vmem>>, vector<1x32xf32>,
    %c3_i32_126 = arith.constant 3 : i32
    %199 = arith.addi %0, %c3_i32_126 : i32
    %c5_i32_127 = arith.constant 5 : i32
    %200 = arith.muli %199, %c5_i32_127 : i32
    %c0_i32_128 = arith.constant 0 : i32
    %201 = arith.addi %200, %c0_i32_128 : i32
    %202 = arith.index_cast %201 : i32 to index
    %203 = memref.load %arg3[%202] : memref<40xi32, #tpu.memory_space<smem>>
    %204 = arith.index_cast %203 : i32 to index
    %c0_129 = arith.constant 0 : index
    %205 = vector.load %arg5[%204, %c0_129] : memref<64x32xf32, #tpu.memory_space<vmem>>, vector<1x32xf32>
    %c0_130 = arith.constant 0 : index
    %c3_131 = arith.constant 3 : index
    %c0_132 = arith.constant 0 : index
    %206 = vector.load %arg9[%c0_130, %c3_131, %c0_132] : memref<5x8x32xf32, #tpu.memory_space<vmem>>, vector<1x1x32xf32>
    %207 = vector.shape_cast %206 : vector<1x1x32xf32> to vector<1x32xf32>
    %208 = vector.shape_cast %205 : vector<1x32xf32> to vector<1x1x32xf32>
    tpu.vector_store %arg9[%c0_130, %c3_131, %c0_132], %208 {strides = array<i32>} : memref<5x8x32xf32, #tpu.memory_space<vmem>>, vector<1x1x32xf32>,
    %c3_i32_133 = arith.constant 3 : i32
    %209 = arith.addi %0, %c3_i32_133 : i32
    %c5_i32_134 = arith.constant 5 : i32
    %210 = arith.muli %209, %c5_i32_134 : i32
    %c1_i32_135 = arith.constant 1 : i32
    %211 = arith.addi %210, %c1_i32_135 : i32
    %212 = arith.index_cast %211 : i32 to index
    %213 = memref.load %arg3[%212] : memref<40xi32, #tpu.memory_space<smem>>
    %214 = arith.index_cast %213 : i32 to index
    %c0_136 = arith.constant 0 : index
    %215 = vector.load %arg5[%214, %c0_136] : memref<64x32xf32, #tpu.memory_space<vmem>>, vector<1x32xf32>
    %c1_137 = arith.constant 1 : index
    %c3_138 = arith.constant 3 : index
    %c0_139 = arith.constant 0 : index
    %216 = vector.load %arg9[%c1_137, %c3_138, %c0_139] : memref<5x8x32xf32, #tpu.memory_space<vmem>>, vector<1x1x32xf32>
    %217 = vector.shape_cast %216 : vector<1x1x32xf32> to vector<1x32xf32>
    %218 = vector.shape_cast %215 : vector<1x32xf32> to vector<1x1x32xf32>
    tpu.vector_store %arg9[%c1_137, %c3_138, %c0_139], %218 {strides = array<i32>} : memref<5x8x32xf32, #tpu.memory_space<vmem>>, vector<1x1x32xf32>,
    %c3_i32_140 = arith.constant 3 : i32
    %219 = arith.addi %0, %c3_i32_140 : i32
    %c5_i32_141 = arith.constant 5 : i32
    %220 = arith.muli %219, %c5_i32_141 : i32
    %c2_i32_142 = arith.constant 2 : i32
    %221 = arith.addi %220, %c2_i32_142 : i32
    %222 = arith.index_cast %221 : i32 to index
    %223 = memref.load %arg3[%222] : memref<40xi32, #tpu.memory_space<smem>>
    %224 = arith.index_cast %223 : i32 to index
    %c0_143 = arith.constant 0 : index
    %225 = vector.load %arg5[%224, %c0_143] : memref<64x32xf32, #tpu.memory_space<vmem>>, vector<1x32xf32>
    %c2_144 = arith.constant 2 : index
    %c3_145 = arith.constant 3 : index
    %c0_146 = arith.constant 0 : index
    %226 = vector.load %arg9[%c2_144, %c3_145, %c0_146] : memref<5x8x32xf32, #tpu.memory_space<vmem>>, vector<1x1x32xf32>
    %227 = vector.shape_cast %226 : vector<1x1x32xf32> to vector<1x32xf32>
    %228 = vector.shape_cast %225 : vector<1x32xf32> to vector<1x1x32xf32>
    tpu.vector_store %arg9[%c2_144, %c3_145, %c0_146], %228 {strides = array<i32>} : memref<5x8x32xf32, #tpu.memory_space<vmem>>, vector<1x1x32xf32>,
    %c3_i32_147 = arith.constant 3 : i32
    %229 = arith.addi %0, %c3_i32_147 : i32
    %c5_i32_148 = arith.constant 5 : i32
    %230 = arith.muli %229, %c5_i32_148 : i32
    %c3_i32_149 = arith.constant 3 : i32
    %231 = arith.addi %230, %c3_i32_149 : i32
    %232 = arith.index_cast %231 : i32 to index
    %233 = memref.load %arg3[%232] : memref<40xi32, #tpu.memory_space<smem>>
    %234 = arith.index_cast %233 : i32 to index
    %c0_150 = arith.constant 0 : index
    %235 = vector.load %arg5[%234, %c0_150] : memref<64x32xf32, #tpu.memory_space<vmem>>, vector<1x32xf32>
    %c3_151 = arith.constant 3 : index
    %c3_152 = arith.constant 3 : index
    %c0_153 = arith.constant 0 : index
    %236 = vector.load %arg9[%c3_151, %c3_152, %c0_153] : memref<5x8x32xf32, #tpu.memory_space<vmem>>, vector<1x1x32xf32>
    %237 = vector.shape_cast %236 : vector<1x1x32xf32> to vector<1x32xf32>
    %238 = vector.shape_cast %235 : vector<1x32xf32> to vector<1x1x32xf32>
    tpu.vector_store %arg9[%c3_151, %c3_152, %c0_153], %238 {strides = array<i32>} : memref<5x8x32xf32, #tpu.memory_space<vmem>>, vector<1x1x32xf32>,
    %c3_i32_154 = arith.constant 3 : i32
    %239 = arith.addi %0, %c3_i32_154 : i32
    %c5_i32_155 = arith.constant 5 : i32
    %240 = arith.muli %239, %c5_i32_155 : i32
    %c4_i32_156 = arith.constant 4 : i32
    %241 = arith.addi %240, %c4_i32_156 : i32
    %242 = arith.index_cast %241 : i32 to index
    %243 = memref.load %arg3[%242] : memref<40xi32, #tpu.memory_space<smem>>
    %244 = arith.index_cast %243 : i32 to index
    %c0_157 = arith.constant 0 : index
    %245 = vector.load %arg5[%244, %c0_157] : memref<64x32xf32, #tpu.memory_space<vmem>>, vector<1x32xf32>
    %c4_158 = arith.constant 4 : index
    %c3_159 = arith.constant 3 : index
    %c0_160 = arith.constant 0 : index
    %246 = vector.load %arg9[%c4_158, %c3_159, %c0_160] : memref<5x8x32xf32, #tpu.memory_space<vmem>>, vector<1x1x32xf32>
    %247 = vector.shape_cast %246 : vector<1x1x32xf32> to vector<1x32xf32>
    %248 = vector.shape_cast %245 : vector<1x32xf32> to vector<1x1x32xf32>
    tpu.vector_store %arg9[%c4_158, %c3_159, %c0_160], %248 {strides = array<i32>} : memref<5x8x32xf32, #tpu.memory_space<vmem>>, vector<1x1x32xf32>,
    %c4_i32_161 = arith.constant 4 : i32
    %249 = arith.addi %0, %c4_i32_161 : i32
    %250 = arith.index_cast %249 : i32 to index
    %251 = memref.load %arg1[%250] : memref<8xi32, #tpu.memory_space<smem>>
    %c4_i32_162 = arith.constant 4 : i32
    %252 = arith.addi %0, %c4_i32_162 : i32
    %253 = arith.index_cast %252 : i32 to index
    %254 = memref.load %arg2[%253] : memref<8xi32, #tpu.memory_space<smem>>
    %255 = arith.index_cast %251 : i32 to index
    %c0_163 = arith.constant 0 : index
    %256 = vector.load %arg4[%255, %c0_163] : memref<64x32xf32, #tpu.memory_space<vmem>>, vector<1x32xf32>
    %c4_164 = arith.constant 4 : index
    %c0_165 = arith.constant 0 : index
    %257 = vector.load %arg7[%c4_164, %c0_165] : memref<8x32xf32, #tpu.memory_space<vmem>>, vector<1x32xf32>
    tpu.vector_store %arg7[%c4_164, %c0_165], %256 {strides = array<i32>} : memref<8x32xf32, #tpu.memory_space<vmem>>, vector<1x32xf32>,
    %258 = arith.index_cast %254 : i32 to index
    %c0_166 = arith.constant 0 : index
    %259 = vector.load %arg5[%258, %c0_166] : memref<64x32xf32, #tpu.memory_space<vmem>>, vector<1x32xf32>
    %c4_167 = arith.constant 4 : index
    %c0_168 = arith.constant 0 : index
    %260 = vector.load %arg8[%c4_167, %c0_168] : memref<8x32xf32, #tpu.memory_space<vmem>>, vector<1x32xf32>
    tpu.vector_store %arg8[%c4_167, %c0_168], %259 {strides = array<i32>} : memref<8x32xf32, #tpu.memory_space<vmem>>, vector<1x32xf32>,
    %c4_i32_169 = arith.constant 4 : i32
    %261 = arith.addi %0, %c4_i32_169 : i32
    %c5_i32_170 = arith.constant 5 : i32
    %262 = arith.muli %261, %c5_i32_170 : i32
    %c0_i32_171 = arith.constant 0 : i32
    %263 = arith.addi %262, %c0_i32_171 : i32
    %264 = arith.index_cast %263 : i32 to index
    %265 = memref.load %arg3[%264] : memref<40xi32, #tpu.memory_space<smem>>
    %266 = arith.index_cast %265 : i32 to index
    %c0_172 = arith.constant 0 : index
    %267 = vector.load %arg5[%266, %c0_172] : memref<64x32xf32, #tpu.memory_space<vmem>>, vector<1x32xf32>
    %c0_173 = arith.constant 0 : index
    %c4_174 = arith.constant 4 : index
    %c0_175 = arith.constant 0 : index
    %268 = vector.load %arg9[%c0_173, %c4_174, %c0_175] : memref<5x8x32xf32, #tpu.memory_space<vmem>>, vector<1x1x32xf32>
    %269 = vector.shape_cast %268 : vector<1x1x32xf32> to vector<1x32xf32>
    %270 = vector.shape_cast %267 : vector<1x32xf32> to vector<1x1x32xf32>
    tpu.vector_store %arg9[%c0_173, %c4_174, %c0_175], %270 {strides = array<i32>} : memref<5x8x32xf32, #tpu.memory_space<vmem>>, vector<1x1x32xf32>,
    %c4_i32_176 = arith.constant 4 : i32
    %271 = arith.addi %0, %c4_i32_176 : i32
    %c5_i32_177 = arith.constant 5 : i32
    %272 = arith.muli %271, %c5_i32_177 : i32
    %c1_i32_178 = arith.constant 1 : i32
    %273 = arith.addi %272, %c1_i32_178 : i32
    %274 = arith.index_cast %273 : i32 to index
    %275 = memref.load %arg3[%274] : memref<40xi32, #tpu.memory_space<smem>>
    %276 = arith.index_cast %275 : i32 to index
    %c0_179 = arith.constant 0 : index
    %277 = vector.load %arg5[%276, %c0_179] : memref<64x32xf32, #tpu.memory_space<vmem>>, vector<1x32xf32>
    %c1_180 = arith.constant 1 : index
    %c4_181 = arith.constant 4 : index
    %c0_182 = arith.constant 0 : index
    %278 = vector.load %arg9[%c1_180, %c4_181, %c0_182] : memref<5x8x32xf32, #tpu.memory_space<vmem>>, vector<1x1x32xf32>
    %279 = vector.shape_cast %278 : vector<1x1x32xf32> to vector<1x32xf32>
    %280 = vector.shape_cast %277 : vector<1x32xf32> to vector<1x1x32xf32>
    tpu.vector_store %arg9[%c1_180, %c4_181, %c0_182], %280 {strides = array<i32>} : memref<5x8x32xf32, #tpu.memory_space<vmem>>, vector<1x1x32xf32>,
    %c4_i32_183 = arith.constant 4 : i32
    %281 = arith.addi %0, %c4_i32_183 : i32
    %c5_i32_184 = arith.constant 5 : i32
    %282 = arith.muli %281, %c5_i32_184 : i32
    %c2_i32_185 = arith.constant 2 : i32
    %283 = arith.addi %282, %c2_i32_185 : i32
    %284 = arith.index_cast %283 : i32 to index
    %285 = memref.load %arg3[%284] : memref<40xi32, #tpu.memory_space<smem>>
    %286 = arith.index_cast %285 : i32 to index
    %c0_186 = arith.constant 0 : index
    %287 = vector.load %arg5[%286, %c0_186] : memref<64x32xf32, #tpu.memory_space<vmem>>, vector<1x32xf32>
    %c2_187 = arith.constant 2 : index
    %c4_188 = arith.constant 4 : index
    %c0_189 = arith.constant 0 : index
    %288 = vector.load %arg9[%c2_187, %c4_188, %c0_189] : memref<5x8x32xf32, #tpu.memory_space<vmem>>, vector<1x1x32xf32>
    %289 = vector.shape_cast %288 : vector<1x1x32xf32> to vector<1x32xf32>
    %290 = vector.shape_cast %287 : vector<1x32xf32> to vector<1x1x32xf32>
    tpu.vector_store %arg9[%c2_187, %c4_188, %c0_189], %290 {strides = array<i32>} : memref<5x8x32xf32, #tpu.memory_space<vmem>>, vector<1x1x32xf32>,
    %c4_i32_190 = arith.constant 4 : i32
    %291 = arith.addi %0, %c4_i32_190 : i32
    %c5_i32_191 = arith.constant 5 : i32
    %292 = arith.muli %291, %c5_i32_191 : i32
    %c3_i32_192 = arith.constant 3 : i32
    %293 = arith.addi %292, %c3_i32_192 : i32
    %294 = arith.index_cast %293 : i32 to index
    %295 = memref.load %arg3[%294] : memref<40xi32, #tpu.memory_space<smem>>
    %296 = arith.index_cast %295 : i32 to index
    %c0_193 = arith.constant 0 : index
    %297 = vector.load %arg5[%296, %c0_193] : memref<64x32xf32, #tpu.memory_space<vmem>>, vector<1x32xf32>
    %c3_194 = arith.constant 3 : index
    %c4_195 = arith.constant 4 : index
    %c0_196 = arith.constant 0 : index
    %298 = vector.load %arg9[%c3_194, %c4_195, %c0_196] : memref<5x8x32xf32, #tpu.memory_space<vmem>>, vector<1x1x32xf32>
    %299 = vector.shape_cast %298 : vector<1x1x32xf32> to vector<1x32xf32>
    %300 = vector.shape_cast %297 : vector<1x32xf32> to vector<1x1x32xf32>
    tpu.vector_store %arg9[%c3_194, %c4_195, %c0_196], %300 {strides = array<i32>} : memref<5x8x32xf32, #tpu.memory_space<vmem>>, vector<1x1x32xf32>,
    %c4_i32_197 = arith.constant 4 : i32
    %301 = arith.addi %0, %c4_i32_197 : i32
    %c5_i32_198 = arith.constant 5 : i32
    %302 = arith.muli %301, %c5_i32_198 : i32
    %c4_i32_199 = arith.constant 4 : i32
    %303 = arith.addi %302, %c4_i32_199 : i32
    %304 = arith.index_cast %303 : i32 to index
    %305 = memref.load %arg3[%304] : memref<40xi32, #tpu.memory_space<smem>>
    %306 = arith.index_cast %305 : i32 to index
    %c0_200 = arith.constant 0 : index
    %307 = vector.load %arg5[%306, %c0_200] : memref<64x32xf32, #tpu.memory_space<vmem>>, vector<1x32xf32>
    %c4_201 = arith.constant 4 : index
    %c4_202 = arith.constant 4 : index
    %c0_203 = arith.constant 0 : index
    %308 = vector.load %arg9[%c4_201, %c4_202, %c0_203] : memref<5x8x32xf32, #tpu.memory_space<vmem>>, vector<1x1x32xf32>
    %309 = vector.shape_cast %308 : vector<1x1x32xf32> to vector<1x32xf32>
    %310 = vector.shape_cast %307 : vector<1x32xf32> to vector<1x1x32xf32>
    tpu.vector_store %arg9[%c4_201, %c4_202, %c0_203], %310 {strides = array<i32>} : memref<5x8x32xf32, #tpu.memory_space<vmem>>, vector<1x1x32xf32>,
    %c5_i32_204 = arith.constant 5 : i32
    %311 = arith.addi %0, %c5_i32_204 : i32
    %312 = arith.index_cast %311 : i32 to index
    %313 = memref.load %arg1[%312] : memref<8xi32, #tpu.memory_space<smem>>
    %c5_i32_205 = arith.constant 5 : i32
    %314 = arith.addi %0, %c5_i32_205 : i32
    %315 = arith.index_cast %314 : i32 to index
    %316 = memref.load %arg2[%315] : memref<8xi32, #tpu.memory_space<smem>>
    %317 = arith.index_cast %313 : i32 to index
    %c0_206 = arith.constant 0 : index
    %318 = vector.load %arg4[%317, %c0_206] : memref<64x32xf32, #tpu.memory_space<vmem>>, vector<1x32xf32>
    %c5 = arith.constant 5 : index
    %c0_207 = arith.constant 0 : index
    %319 = vector.load %arg7[%c5, %c0_207] : memref<8x32xf32, #tpu.memory_space<vmem>>, vector<1x32xf32>
    tpu.vector_store %arg7[%c5, %c0_207], %318 {strides = array<i32>} : memref<8x32xf32, #tpu.memory_space<vmem>>, vector<1x32xf32>,
    %320 = arith.index_cast %316 : i32 to index
    %c0_208 = arith.constant 0 : index
    %321 = vector.load %arg5[%320, %c0_208] : memref<64x32xf32, #tpu.memory_space<vmem>>, vector<1x32xf32>
    %c5_209 = arith.constant 5 : index
    %c0_210 = arith.constant 0 : index
    %322 = vector.load %arg8[%c5_209, %c0_210] : memref<8x32xf32, #tpu.memory_space<vmem>>, vector<1x32xf32>
    tpu.vector_store %arg8[%c5_209, %c0_210], %321 {strides = array<i32>} : memref<8x32xf32, #tpu.memory_space<vmem>>, vector<1x32xf32>,
    %c5_i32_211 = arith.constant 5 : i32
    %323 = arith.addi %0, %c5_i32_211 : i32
    %c5_i32_212 = arith.constant 5 : i32
    %324 = arith.muli %323, %c5_i32_212 : i32
    %c0_i32_213 = arith.constant 0 : i32
    %325 = arith.addi %324, %c0_i32_213 : i32
    %326 = arith.index_cast %325 : i32 to index
    %327 = memref.load %arg3[%326] : memref<40xi32, #tpu.memory_space<smem>>
    %328 = arith.index_cast %327 : i32 to index
    %c0_214 = arith.constant 0 : index
    %329 = vector.load %arg5[%328, %c0_214] : memref<64x32xf32, #tpu.memory_space<vmem>>, vector<1x32xf32>
    %c0_215 = arith.constant 0 : index
    %c5_216 = arith.constant 5 : index
    %c0_217 = arith.constant 0 : index
    %330 = vector.load %arg9[%c0_215, %c5_216, %c0_217] : memref<5x8x32xf32, #tpu.memory_space<vmem>>, vector<1x1x32xf32>
    %331 = vector.shape_cast %330 : vector<1x1x32xf32> to vector<1x32xf32>
    %332 = vector.shape_cast %329 : vector<1x32xf32> to vector<1x1x32xf32>
    tpu.vector_store %arg9[%c0_215, %c5_216, %c0_217], %332 {strides = array<i32>} : memref<5x8x32xf32, #tpu.memory_space<vmem>>, vector<1x1x32xf32>,
    %c5_i32_218 = arith.constant 5 : i32
    %333 = arith.addi %0, %c5_i32_218 : i32
    %c5_i32_219 = arith.constant 5 : i32
    %334 = arith.muli %333, %c5_i32_219 : i32
    %c1_i32_220 = arith.constant 1 : i32
    %335 = arith.addi %334, %c1_i32_220 : i32
    %336 = arith.index_cast %335 : i32 to index
    %337 = memref.load %arg3[%336] : memref<40xi32, #tpu.memory_space<smem>>
    %338 = arith.index_cast %337 : i32 to index
    %c0_221 = arith.constant 0 : index
    %339 = vector.load %arg5[%338, %c0_221] : memref<64x32xf32, #tpu.memory_space<vmem>>, vector<1x32xf32>
    %c1_222 = arith.constant 1 : index
    %c5_223 = arith.constant 5 : index
    %c0_224 = arith.constant 0 : index
    %340 = vector.load %arg9[%c1_222, %c5_223, %c0_224] : memref<5x8x32xf32, #tpu.memory_space<vmem>>, vector<1x1x32xf32>
    %341 = vector.shape_cast %340 : vector<1x1x32xf32> to vector<1x32xf32>
    %342 = vector.shape_cast %339 : vector<1x32xf32> to vector<1x1x32xf32>
    tpu.vector_store %arg9[%c1_222, %c5_223, %c0_224], %342 {strides = array<i32>} : memref<5x8x32xf32, #tpu.memory_space<vmem>>, vector<1x1x32xf32>,
    %c5_i32_225 = arith.constant 5 : i32
    %343 = arith.addi %0, %c5_i32_225 : i32
    %c5_i32_226 = arith.constant 5 : i32
    %344 = arith.muli %343, %c5_i32_226 : i32
    %c2_i32_227 = arith.constant 2 : i32
    %345 = arith.addi %344, %c2_i32_227 : i32
    %346 = arith.index_cast %345 : i32 to index
    %347 = memref.load %arg3[%346] : memref<40xi32, #tpu.memory_space<smem>>
    %348 = arith.index_cast %347 : i32 to index
    %c0_228 = arith.constant 0 : index
    %349 = vector.load %arg5[%348, %c0_228] : memref<64x32xf32, #tpu.memory_space<vmem>>, vector<1x32xf32>
    %c2_229 = arith.constant 2 : index
    %c5_230 = arith.constant 5 : index
    %c0_231 = arith.constant 0 : index
    %350 = vector.load %arg9[%c2_229, %c5_230, %c0_231] : memref<5x8x32xf32, #tpu.memory_space<vmem>>, vector<1x1x32xf32>
    %351 = vector.shape_cast %350 : vector<1x1x32xf32> to vector<1x32xf32>
    %352 = vector.shape_cast %349 : vector<1x32xf32> to vector<1x1x32xf32>
    tpu.vector_store %arg9[%c2_229, %c5_230, %c0_231], %352 {strides = array<i32>} : memref<5x8x32xf32, #tpu.memory_space<vmem>>, vector<1x1x32xf32>,
    %c5_i32_232 = arith.constant 5 : i32
    %353 = arith.addi %0, %c5_i32_232 : i32
    %c5_i32_233 = arith.constant 5 : i32
    %354 = arith.muli %353, %c5_i32_233 : i32
    %c3_i32_234 = arith.constant 3 : i32
    %355 = arith.addi %354, %c3_i32_234 : i32
    %356 = arith.index_cast %355 : i32 to index
    %357 = memref.load %arg3[%356] : memref<40xi32, #tpu.memory_space<smem>>
    %358 = arith.index_cast %357 : i32 to index
    %c0_235 = arith.constant 0 : index
    %359 = vector.load %arg5[%358, %c0_235] : memref<64x32xf32, #tpu.memory_space<vmem>>, vector<1x32xf32>
    %c3_236 = arith.constant 3 : index
    %c5_237 = arith.constant 5 : index
    %c0_238 = arith.constant 0 : index
    %360 = vector.load %arg9[%c3_236, %c5_237, %c0_238] : memref<5x8x32xf32, #tpu.memory_space<vmem>>, vector<1x1x32xf32>
    %361 = vector.shape_cast %360 : vector<1x1x32xf32> to vector<1x32xf32>
    %362 = vector.shape_cast %359 : vector<1x32xf32> to vector<1x1x32xf32>
    tpu.vector_store %arg9[%c3_236, %c5_237, %c0_238], %362 {strides = array<i32>} : memref<5x8x32xf32, #tpu.memory_space<vmem>>, vector<1x1x32xf32>,
    %c5_i32_239 = arith.constant 5 : i32
    %363 = arith.addi %0, %c5_i32_239 : i32
    %c5_i32_240 = arith.constant 5 : i32
    %364 = arith.muli %363, %c5_i32_240 : i32
    %c4_i32_241 = arith.constant 4 : i32
    %365 = arith.addi %364, %c4_i32_241 : i32
    %366 = arith.index_cast %365 : i32 to index
    %367 = memref.load %arg3[%366] : memref<40xi32, #tpu.memory_space<smem>>
    %368 = arith.index_cast %367 : i32 to index
    %c0_242 = arith.constant 0 : index
    %369 = vector.load %arg5[%368, %c0_242] : memref<64x32xf32, #tpu.memory_space<vmem>>, vector<1x32xf32>
    %c4_243 = arith.constant 4 : index
    %c5_244 = arith.constant 5 : index
    %c0_245 = arith.constant 0 : index
    %370 = vector.load %arg9[%c4_243, %c5_244, %c0_245] : memref<5x8x32xf32, #tpu.memory_space<vmem>>, vector<1x1x32xf32>
    %371 = vector.shape_cast %370 : vector<1x1x32xf32> to vector<1x32xf32>
    %372 = vector.shape_cast %369 : vector<1x32xf32> to vector<1x1x32xf32>
    tpu.vector_store %arg9[%c4_243, %c5_244, %c0_245], %372 {strides = array<i32>} : memref<5x8x32xf32, #tpu.memory_space<vmem>>, vector<1x1x32xf32>,
    %c6_i32 = arith.constant 6 : i32
    %373 = arith.addi %0, %c6_i32 : i32
    %374 = arith.index_cast %373 : i32 to index
    %375 = memref.load %arg1[%374] : memref<8xi32, #tpu.memory_space<smem>>
    %c6_i32_246 = arith.constant 6 : i32
    %376 = arith.addi %0, %c6_i32_246 : i32
    %377 = arith.index_cast %376 : i32 to index
    %378 = memref.load %arg2[%377] : memref<8xi32, #tpu.memory_space<smem>>
    %379 = arith.index_cast %375 : i32 to index
    %c0_247 = arith.constant 0 : index
    %380 = vector.load %arg4[%379, %c0_247] : memref<64x32xf32, #tpu.memory_space<vmem>>, vector<1x32xf32>
    %c6 = arith.constant 6 : index
    %c0_248 = arith.constant 0 : index
    %381 = vector.load %arg7[%c6, %c0_248] : memref<8x32xf32, #tpu.memory_space<vmem>>, vector<1x32xf32>
    tpu.vector_store %arg7[%c6, %c0_248], %380 {strides = array<i32>} : memref<8x32xf32, #tpu.memory_space<vmem>>, vector<1x32xf32>,
    %382 = arith.index_cast %378 : i32 to index
    %c0_249 = arith.constant 0 : index
    %383 = vector.load %arg5[%382, %c0_249] : memref<64x32xf32, #tpu.memory_space<vmem>>, vector<1x32xf32>
    %c6_250 = arith.constant 6 : index
    %c0_251 = arith.constant 0 : index
    %384 = vector.load %arg8[%c6_250, %c0_251] : memref<8x32xf32, #tpu.memory_space<vmem>>, vector<1x32xf32>
    tpu.vector_store %arg8[%c6_250, %c0_251], %383 {strides = array<i32>} : memref<8x32xf32, #tpu.memory_space<vmem>>, vector<1x32xf32>,
    %c6_i32_252 = arith.constant 6 : i32
    %385 = arith.addi %0, %c6_i32_252 : i32
    %c5_i32_253 = arith.constant 5 : i32
    %386 = arith.muli %385, %c5_i32_253 : i32
    %c0_i32_254 = arith.constant 0 : i32
    %387 = arith.addi %386, %c0_i32_254 : i32
    %388 = arith.index_cast %387 : i32 to index
    %389 = memref.load %arg3[%388] : memref<40xi32, #tpu.memory_space<smem>>
    %390 = arith.index_cast %389 : i32 to index
    %c0_255 = arith.constant 0 : index
    %391 = vector.load %arg5[%390, %c0_255] : memref<64x32xf32, #tpu.memory_space<vmem>>, vector<1x32xf32>
    %c0_256 = arith.constant 0 : index
    %c6_257 = arith.constant 6 : index
    %c0_258 = arith.constant 0 : index
    %392 = vector.load %arg9[%c0_256, %c6_257, %c0_258] : memref<5x8x32xf32, #tpu.memory_space<vmem>>, vector<1x1x32xf32>
    %393 = vector.shape_cast %392 : vector<1x1x32xf32> to vector<1x32xf32>
    %394 = vector.shape_cast %391 : vector<1x32xf32> to vector<1x1x32xf32>
    tpu.vector_store %arg9[%c0_256, %c6_257, %c0_258], %394 {strides = array<i32>} : memref<5x8x32xf32, #tpu.memory_space<vmem>>, vector<1x1x32xf32>,
    %c6_i32_259 = arith.constant 6 : i32
    %395 = arith.addi %0, %c6_i32_259 : i32
    %c5_i32_260 = arith.constant 5 : i32
    %396 = arith.muli %395, %c5_i32_260 : i32
    %c1_i32_261 = arith.constant 1 : i32
    %397 = arith.addi %396, %c1_i32_261 : i32
    %398 = arith.index_cast %397 : i32 to index
    %399 = memref.load %arg3[%398] : memref<40xi32, #tpu.memory_space<smem>>
    %400 = arith.index_cast %399 : i32 to index
    %c0_262 = arith.constant 0 : index
    %401 = vector.load %arg5[%400, %c0_262] : memref<64x32xf32, #tpu.memory_space<vmem>>, vector<1x32xf32>
    %c1_263 = arith.constant 1 : index
    %c6_264 = arith.constant 6 : index
    %c0_265 = arith.constant 0 : index
    %402 = vector.load %arg9[%c1_263, %c6_264, %c0_265] : memref<5x8x32xf32, #tpu.memory_space<vmem>>, vector<1x1x32xf32>
    %403 = vector.shape_cast %402 : vector<1x1x32xf32> to vector<1x32xf32>
    %404 = vector.shape_cast %401 : vector<1x32xf32> to vector<1x1x32xf32>
    tpu.vector_store %arg9[%c1_263, %c6_264, %c0_265], %404 {strides = array<i32>} : memref<5x8x32xf32, #tpu.memory_space<vmem>>, vector<1x1x32xf32>,
    %c6_i32_266 = arith.constant 6 : i32
    %405 = arith.addi %0, %c6_i32_266 : i32
    %c5_i32_267 = arith.constant 5 : i32
    %406 = arith.muli %405, %c5_i32_267 : i32
    %c2_i32_268 = arith.constant 2 : i32
    %407 = arith.addi %406, %c2_i32_268 : i32
    %408 = arith.index_cast %407 : i32 to index
    %409 = memref.load %arg3[%408] : memref<40xi32, #tpu.memory_space<smem>>
    %410 = arith.index_cast %409 : i32 to index
    %c0_269 = arith.constant 0 : index
    %411 = vector.load %arg5[%410, %c0_269] : memref<64x32xf32, #tpu.memory_space<vmem>>, vector<1x32xf32>
    %c2_270 = arith.constant 2 : index
    %c6_271 = arith.constant 6 : index
    %c0_272 = arith.constant 0 : index
    %412 = vector.load %arg9[%c2_270, %c6_271, %c0_272] : memref<5x8x32xf32, #tpu.memory_space<vmem>>, vector<1x1x32xf32>
    %413 = vector.shape_cast %412 : vector<1x1x32xf32> to vector<1x32xf32>
    %414 = vector.shape_cast %411 : vector<1x32xf32> to vector<1x1x32xf32>
    tpu.vector_store %arg9[%c2_270, %c6_271, %c0_272], %414 {strides = array<i32>} : memref<5x8x32xf32, #tpu.memory_space<vmem>>, vector<1x1x32xf32>,
    %c6_i32_273 = arith.constant 6 : i32
    %415 = arith.addi %0, %c6_i32_273 : i32
    %c5_i32_274 = arith.constant 5 : i32
    %416 = arith.muli %415, %c5_i32_274 : i32
    %c3_i32_275 = arith.constant 3 : i32
    %417 = arith.addi %416, %c3_i32_275 : i32
    %418 = arith.index_cast %417 : i32 to index
    %419 = memref.load %arg3[%418] : memref<40xi32, #tpu.memory_space<smem>>
    %420 = arith.index_cast %419 : i32 to index
    %c0_276 = arith.constant 0 : index
    %421 = vector.load %arg5[%420, %c0_276] : memref<64x32xf32, #tpu.memory_space<vmem>>, vector<1x32xf32>
    %c3_277 = arith.constant 3 : index
    %c6_278 = arith.constant 6 : index
    %c0_279 = arith.constant 0 : index
    %422 = vector.load %arg9[%c3_277, %c6_278, %c0_279] : memref<5x8x32xf32, #tpu.memory_space<vmem>>, vector<1x1x32xf32>
    %423 = vector.shape_cast %422 : vector<1x1x32xf32> to vector<1x32xf32>
    %424 = vector.shape_cast %421 : vector<1x32xf32> to vector<1x1x32xf32>
    tpu.vector_store %arg9[%c3_277, %c6_278, %c0_279], %424 {strides = array<i32>} : memref<5x8x32xf32, #tpu.memory_space<vmem>>, vector<1x1x32xf32>,
    %c6_i32_280 = arith.constant 6 : i32
    %425 = arith.addi %0, %c6_i32_280 : i32
    %c5_i32_281 = arith.constant 5 : i32
    %426 = arith.muli %425, %c5_i32_281 : i32
    %c4_i32_282 = arith.constant 4 : i32
    %427 = arith.addi %426, %c4_i32_282 : i32
    %428 = arith.index_cast %427 : i32 to index
    %429 = memref.load %arg3[%428] : memref<40xi32, #tpu.memory_space<smem>>
    %430 = arith.index_cast %429 : i32 to index
    %c0_283 = arith.constant 0 : index
    %431 = vector.load %arg5[%430, %c0_283] : memref<64x32xf32, #tpu.memory_space<vmem>>, vector<1x32xf32>
    %c4_284 = arith.constant 4 : index
    %c6_285 = arith.constant 6 : index
    %c0_286 = arith.constant 0 : index
    %432 = vector.load %arg9[%c4_284, %c6_285, %c0_286] : memref<5x8x32xf32, #tpu.memory_space<vmem>>, vector<1x1x32xf32>
    %433 = vector.shape_cast %432 : vector<1x1x32xf32> to vector<1x32xf32>
    %434 = vector.shape_cast %431 : vector<1x32xf32> to vector<1x1x32xf32>
    tpu.vector_store %arg9[%c4_284, %c6_285, %c0_286], %434 {strides = array<i32>} : memref<5x8x32xf32, #tpu.memory_space<vmem>>, vector<1x1x32xf32>,
    %c7_i32 = arith.constant 7 : i32
    %435 = arith.addi %0, %c7_i32 : i32
    %436 = arith.index_cast %435 : i32 to index
    %437 = memref.load %arg1[%436] : memref<8xi32, #tpu.memory_space<smem>>
    %c7_i32_287 = arith.constant 7 : i32
    %438 = arith.addi %0, %c7_i32_287 : i32
    %439 = arith.index_cast %438 : i32 to index
    %440 = memref.load %arg2[%439] : memref<8xi32, #tpu.memory_space<smem>>
    %441 = arith.index_cast %437 : i32 to index
    %c0_288 = arith.constant 0 : index
    %442 = vector.load %arg4[%441, %c0_288] : memref<64x32xf32, #tpu.memory_space<vmem>>, vector<1x32xf32>
    %c7 = arith.constant 7 : index
    %c0_289 = arith.constant 0 : index
    %443 = vector.load %arg7[%c7, %c0_289] : memref<8x32xf32, #tpu.memory_space<vmem>>, vector<1x32xf32>
    tpu.vector_store %arg7[%c7, %c0_289], %442 {strides = array<i32>} : memref<8x32xf32, #tpu.memory_space<vmem>>, vector<1x32xf32>,
    %444 = arith.index_cast %440 : i32 to index
    %c0_290 = arith.constant 0 : index
    %445 = vector.load %arg5[%444, %c0_290] : memref<64x32xf32, #tpu.memory_space<vmem>>, vector<1x32xf32>
    %c7_291 = arith.constant 7 : index
    %c0_292 = arith.constant 0 : index
    %446 = vector.load %arg8[%c7_291, %c0_292] : memref<8x32xf32, #tpu.memory_space<vmem>>, vector<1x32xf32>
    tpu.vector_store %arg8[%c7_291, %c0_292], %445 {strides = array<i32>} : memref<8x32xf32, #tpu.memory_space<vmem>>, vector<1x32xf32>,
    %c7_i32_293 = arith.constant 7 : i32
    %447 = arith.addi %0, %c7_i32_293 : i32
    %c5_i32_294 = arith.constant 5 : i32
    %448 = arith.muli %447, %c5_i32_294 : i32
    %c0_i32_295 = arith.constant 0 : i32
    %449 = arith.addi %448, %c0_i32_295 : i32
    %450 = arith.index_cast %449 : i32 to index
    %451 = memref.load %arg3[%450] : memref<40xi32, #tpu.memory_space<smem>>
    %452 = arith.index_cast %451 : i32 to index
    %c0_296 = arith.constant 0 : index
    %453 = vector.load %arg5[%452, %c0_296] : memref<64x32xf32, #tpu.memory_space<vmem>>, vector<1x32xf32>
    %c0_297 = arith.constant 0 : index
    %c7_298 = arith.constant 7 : index
    %c0_299 = arith.constant 0 : index
    %454 = vector.load %arg9[%c0_297, %c7_298, %c0_299] : memref<5x8x32xf32, #tpu.memory_space<vmem>>, vector<1x1x32xf32>
    %455 = vector.shape_cast %454 : vector<1x1x32xf32> to vector<1x32xf32>
    %456 = vector.shape_cast %453 : vector<1x32xf32> to vector<1x1x32xf32>
    tpu.vector_store %arg9[%c0_297, %c7_298, %c0_299], %456 {strides = array<i32>} : memref<5x8x32xf32, #tpu.memory_space<vmem>>, vector<1x1x32xf32>,
    %c7_i32_300 = arith.constant 7 : i32
    %457 = arith.addi %0, %c7_i32_300 : i32
    %c5_i32_301 = arith.constant 5 : i32
    %458 = arith.muli %457, %c5_i32_301 : i32
    %c1_i32_302 = arith.constant 1 : i32
    %459 = arith.addi %458, %c1_i32_302 : i32
    %460 = arith.index_cast %459 : i32 to index
    %461 = memref.load %arg3[%460] : memref<40xi32, #tpu.memory_space<smem>>
    %462 = arith.index_cast %461 : i32 to index
    %c0_303 = arith.constant 0 : index
    %463 = vector.load %arg5[%462, %c0_303] : memref<64x32xf32, #tpu.memory_space<vmem>>, vector<1x32xf32>
    %c1_304 = arith.constant 1 : index
    %c7_305 = arith.constant 7 : index
    %c0_306 = arith.constant 0 : index
    %464 = vector.load %arg9[%c1_304, %c7_305, %c0_306] : memref<5x8x32xf32, #tpu.memory_space<vmem>>, vector<1x1x32xf32>
    %465 = vector.shape_cast %464 : vector<1x1x32xf32> to vector<1x32xf32>
    %466 = vector.shape_cast %463 : vector<1x32xf32> to vector<1x1x32xf32>
    tpu.vector_store %arg9[%c1_304, %c7_305, %c0_306], %466 {strides = array<i32>} : memref<5x8x32xf32, #tpu.memory_space<vmem>>, vector<1x1x32xf32>,
    %c7_i32_307 = arith.constant 7 : i32
    %467 = arith.addi %0, %c7_i32_307 : i32
    %c5_i32_308 = arith.constant 5 : i32
    %468 = arith.muli %467, %c5_i32_308 : i32
    %c2_i32_309 = arith.constant 2 : i32
    %469 = arith.addi %468, %c2_i32_309 : i32
    %470 = arith.index_cast %469 : i32 to index
    %471 = memref.load %arg3[%470] : memref<40xi32, #tpu.memory_space<smem>>
    %472 = arith.index_cast %471 : i32 to index
    %c0_310 = arith.constant 0 : index
    %473 = vector.load %arg5[%472, %c0_310] : memref<64x32xf32, #tpu.memory_space<vmem>>, vector<1x32xf32>
    %c2_311 = arith.constant 2 : index
    %c7_312 = arith.constant 7 : index
    %c0_313 = arith.constant 0 : index
    %474 = vector.load %arg9[%c2_311, %c7_312, %c0_313] : memref<5x8x32xf32, #tpu.memory_space<vmem>>, vector<1x1x32xf32>
    %475 = vector.shape_cast %474 : vector<1x1x32xf32> to vector<1x32xf32>
    %476 = vector.shape_cast %473 : vector<1x32xf32> to vector<1x1x32xf32>
    tpu.vector_store %arg9[%c2_311, %c7_312, %c0_313], %476 {strides = array<i32>} : memref<5x8x32xf32, #tpu.memory_space<vmem>>, vector<1x1x32xf32>,
    %c7_i32_314 = arith.constant 7 : i32
    %477 = arith.addi %0, %c7_i32_314 : i32
    %c5_i32_315 = arith.constant 5 : i32
    %478 = arith.muli %477, %c5_i32_315 : i32
    %c3_i32_316 = arith.constant 3 : i32
    %479 = arith.addi %478, %c3_i32_316 : i32
    %480 = arith.index_cast %479 : i32 to index
    %481 = memref.load %arg3[%480] : memref<40xi32, #tpu.memory_space<smem>>
    %482 = arith.index_cast %481 : i32 to index
    %c0_317 = arith.constant 0 : index
    %483 = vector.load %arg5[%482, %c0_317] : memref<64x32xf32, #tpu.memory_space<vmem>>, vector<1x32xf32>
    %c3_318 = arith.constant 3 : index
    %c7_319 = arith.constant 7 : index
    %c0_320 = arith.constant 0 : index
    %484 = vector.load %arg9[%c3_318, %c7_319, %c0_320] : memref<5x8x32xf32, #tpu.memory_space<vmem>>, vector<1x1x32xf32>
    %485 = vector.shape_cast %484 : vector<1x1x32xf32> to vector<1x32xf32>
    %486 = vector.shape_cast %483 : vector<1x32xf32> to vector<1x1x32xf32>
    tpu.vector_store %arg9[%c3_318, %c7_319, %c0_320], %486 {strides = array<i32>} : memref<5x8x32xf32, #tpu.memory_space<vmem>>, vector<1x1x32xf32>,
    %c7_i32_321 = arith.constant 7 : i32
    %487 = arith.addi %0, %c7_i32_321 : i32
    %c5_i32_322 = arith.constant 5 : i32
    %488 = arith.muli %487, %c5_i32_322 : i32
    %c4_i32_323 = arith.constant 4 : i32
    %489 = arith.addi %488, %c4_i32_323 : i32
    %490 = arith.index_cast %489 : i32 to index
    %491 = memref.load %arg3[%490] : memref<40xi32, #tpu.memory_space<smem>>
    %492 = arith.index_cast %491 : i32 to index
    %c0_324 = arith.constant 0 : index
    %493 = vector.load %arg5[%492, %c0_324] : memref<64x32xf32, #tpu.memory_space<vmem>>, vector<1x32xf32>
    %c4_325 = arith.constant 4 : index
    %c7_326 = arith.constant 7 : index
    %c0_327 = arith.constant 0 : index
    %494 = vector.load %arg9[%c4_325, %c7_326, %c0_327] : memref<5x8x32xf32, #tpu.memory_space<vmem>>, vector<1x1x32xf32>
    %495 = vector.shape_cast %494 : vector<1x1x32xf32> to vector<1x32xf32>
    %496 = vector.shape_cast %493 : vector<1x32xf32> to vector<1x1x32xf32>
    tpu.vector_store %arg9[%c4_325, %c7_326, %c0_327], %496 {strides = array<i32>} : memref<5x8x32xf32, #tpu.memory_space<vmem>>, vector<1x1x32xf32>,
    %c0_328 = arith.constant 0 : index
    %c0_329 = arith.constant 0 : index
    %497 = vector.load %arg7[%c0_328, %c0_329] : memref<8x32xf32, #tpu.memory_space<vmem>>, vector<8x32xf32>
    %c0_330 = arith.constant 0 : index
    %c0_331 = arith.constant 0 : index
    %498 = vector.load %arg8[%c0_330, %c0_331] : memref<8x32xf32, #tpu.memory_space<vmem>>, vector<8x32xf32>
    %499 = arith.mulf %497, %498 : vector<8x32xf32>
    %cst = arith.constant dense<0.000000e+00> : vector<8xf32>
    %500 = vector.multi_reduction <add>, %499, %cst [1] : vector<8x32xf32> to vector<8xf32>
    %501 = vector.shape_cast %500 : vector<8xf32> to vector<8x1xf32>
    %cst_332 = arith.constant -1.000000e+01 : f32
    %cst_333 = arith.constant 1.000000e+01 : f32
    %502 = vector.broadcast %cst_332 : f32 to vector<8x1xf32>
    %503 = arith.maximumf %502, %501 : vector<8x1xf32>
    %504 = vector.broadcast %cst_333 : f32 to vector<8x1xf32>
    %505 = arith.minimumf %504, %503 : vector<8x1xf32>
    %cst_334 = arith.constant 0.000000e+00 : f32
    %506 = vector.broadcast %cst_334 : f32 to vector<8x1xf32>
    %507 = arith.subf %506, %505 : vector<8x1xf32>
    %508 = math.exp %507 : vector<8x1xf32>
    %cst_335 = arith.constant 1.000000e+00 : f32
    %509 = vector.broadcast %cst_335 : f32 to vector<8x1xf32>
    %510 = arith.addf %509, %508 : vector<8x1xf32>
    %511 = math.log %510 : vector<8x1xf32>
    %c0_336 = arith.constant 0 : index
    %c0_337 = arith.constant 0 : index
    %c0_338 = arith.constant 0 : index
    %512 = vector.load %arg9[%c0_336, %c0_337, %c0_338] : memref<5x8x32xf32, #tpu.memory_space<vmem>>, vector<1x8x32xf32>
    %513 = vector.shape_cast %512 : vector<1x8x32xf32> to vector<8x32xf32>
    %514 = arith.mulf %513, %497 : vector<8x32xf32>
    %cst_339 = arith.constant dense<0.000000e+00> : vector<8xf32>
    %515 = vector.multi_reduction <add>, %514, %cst_339 [1] : vector<8x32xf32> to vector<8xf32>
    %516 = vector.shape_cast %515 : vector<8xf32> to vector<8x1xf32>
    %cst_340 = arith.constant -1.000000e+01 : f32
    %cst_341 = arith.constant 1.000000e+01 : f32
    %517 = vector.broadcast %cst_340 : f32 to vector<8x1xf32>
    %518 = arith.maximumf %517, %516 : vector<8x1xf32>
    %519 = vector.broadcast %cst_341 : f32 to vector<8x1xf32>
    %520 = arith.minimumf %519, %518 : vector<8x1xf32>
    %521 = math.exp %520 : vector<8x1xf32>
    %cst_342 = arith.constant 1.000000e+00 : f32
    %522 = vector.broadcast %cst_342 : f32 to vector<8x1xf32>
    %523 = arith.addf %522, %521 : vector<8x1xf32>
    %524 = math.log %523 : vector<8x1xf32>
    %525 = arith.addf %511, %524 : vector<8x1xf32>
    %c1_343 = arith.constant 1 : index
    %c0_344 = arith.constant 0 : index
    %c0_345 = arith.constant 0 : index
    %526 = vector.load %arg9[%c1_343, %c0_344, %c0_345] : memref<5x8x32xf32, #tpu.memory_space<vmem>>, vector<1x8x32xf32>
    %527 = vector.shape_cast %526 : vector<1x8x32xf32> to vector<8x32xf32>
    %528 = arith.mulf %527, %497 : vector<8x32xf32>
    %cst_346 = arith.constant dense<0.000000e+00> : vector<8xf32>
    %529 = vector.multi_reduction <add>, %528, %cst_346 [1] : vector<8x32xf32> to vector<8xf32>
    %530 = vector.shape_cast %529 : vector<8xf32> to vector<8x1xf32>
    %cst_347 = arith.constant -1.000000e+01 : f32
    %cst_348 = arith.constant 1.000000e+01 : f32
    %531 = vector.broadcast %cst_347 : f32 to vector<8x1xf32>
    %532 = arith.maximumf %531, %530 : vector<8x1xf32>
    %533 = vector.broadcast %cst_348 : f32 to vector<8x1xf32>
    %534 = arith.minimumf %533, %532 : vector<8x1xf32>
    %535 = math.exp %534 : vector<8x1xf32>
    %cst_349 = arith.constant 1.000000e+00 : f32
    %536 = vector.broadcast %cst_349 : f32 to vector<8x1xf32>
    %537 = arith.addf %536, %535 : vector<8x1xf32>
    %538 = math.log %537 : vector<8x1xf32>
    %539 = arith.addf %525, %538 : vector<8x1xf32>
    %c2_350 = arith.constant 2 : index
    %c0_351 = arith.constant 0 : index
    %c0_352 = arith.constant 0 : index
    %540 = vector.load %arg9[%c2_350, %c0_351, %c0_352] : memref<5x8x32xf32, #tpu.memory_space<vmem>>, vector<1x8x32xf32>
    %541 = vector.shape_cast %540 : vector<1x8x32xf32> to vector<8x32xf32>
    %542 = arith.mulf %541, %497 : vector<8x32xf32>
    %cst_353 = arith.constant dense<0.000000e+00> : vector<8xf32>
    %543 = vector.multi_reduction <add>, %542, %cst_353 [1] : vector<8x32xf32> to vector<8xf32>
    %544 = vector.shape_cast %543 : vector<8xf32> to vector<8x1xf32>
    %cst_354 = arith.constant -1.000000e+01 : f32
    %cst_355 = arith.constant 1.000000e+01 : f32
    %545 = vector.broadcast %cst_354 : f32 to vector<8x1xf32>
    %546 = arith.maximumf %545, %544 : vector<8x1xf32>
    %547 = vector.broadcast %cst_355 : f32 to vector<8x1xf32>
    %548 = arith.minimumf %547, %546 : vector<8x1xf32>
    %549 = math.exp %548 : vector<8x1xf32>
    %cst_356 = arith.constant 1.000000e+00 : f32
    %550 = vector.broadcast %cst_356 : f32 to vector<8x1xf32>
    %551 = arith.addf %550, %549 : vector<8x1xf32>
    %552 = math.log %551 : vector<8x1xf32>
    %553 = arith.addf %539, %552 : vector<8x1xf32>
    %c3_357 = arith.constant 3 : index
    %c0_358 = arith.constant 0 : index
    %c0_359 = arith.constant 0 : index
    %554 = vector.load %arg9[%c3_357, %c0_358, %c0_359] : memref<5x8x32xf32, #tpu.memory_space<vmem>>, vector<1x8x32xf32>
    %555 = vector.shape_cast %554 : vector<1x8x32xf32> to vector<8x32xf32>
    %556 = arith.mulf %555, %497 : vector<8x32xf32>
    %cst_360 = arith.constant dense<0.000000e+00> : vector<8xf32>
    %557 = vector.multi_reduction <add>, %556, %cst_360 [1] : vector<8x32xf32> to vector<8xf32>
    %558 = vector.shape_cast %557 : vector<8xf32> to vector<8x1xf32>
    %cst_361 = arith.constant -1.000000e+01 : f32
    %cst_362 = arith.constant 1.000000e+01 : f32
    %559 = vector.broadcast %cst_361 : f32 to vector<8x1xf32>
    %560 = arith.maximumf %559, %558 : vector<8x1xf32>
    %561 = vector.broadcast %cst_362 : f32 to vector<8x1xf32>
    %562 = arith.minimumf %561, %560 : vector<8x1xf32>
    %563 = math.exp %562 : vector<8x1xf32>
    %cst_363 = arith.constant 1.000000e+00 : f32
    %564 = vector.broadcast %cst_363 : f32 to vector<8x1xf32>
    %565 = arith.addf %564, %563 : vector<8x1xf32>
    %566 = math.log %565 : vector<8x1xf32>
    %567 = arith.addf %553, %566 : vector<8x1xf32>
    %c4_364 = arith.constant 4 : index
    %c0_365 = arith.constant 0 : index
    %c0_366 = arith.constant 0 : index
    %568 = vector.load %arg9[%c4_364, %c0_365, %c0_366] : memref<5x8x32xf32, #tpu.memory_space<vmem>>, vector<1x8x32xf32>
    %569 = vector.shape_cast %568 : vector<1x8x32xf32> to vector<8x32xf32>
    %570 = arith.mulf %569, %497 : vector<8x32xf32>
    %cst_367 = arith.constant dense<0.000000e+00> : vector<8xf32>
    %571 = vector.multi_reduction <add>, %570, %cst_367 [1] : vector<8x32xf32> to vector<8xf32>
    %572 = vector.shape_cast %571 : vector<8xf32> to vector<8x1xf32>
    %cst_368 = arith.constant -1.000000e+01 : f32
    %cst_369 = arith.constant 1.000000e+01 : f32
    %573 = vector.broadcast %cst_368 : f32 to vector<8x1xf32>
    %574 = arith.maximumf %573, %572 : vector<8x1xf32>
    %575 = vector.broadcast %cst_369 : f32 to vector<8x1xf32>
    %576 = arith.minimumf %575, %574 : vector<8x1xf32>
    %577 = math.exp %576 : vector<8x1xf32>
    %cst_370 = arith.constant 1.000000e+00 : f32
    %578 = vector.broadcast %cst_370 : f32 to vector<8x1xf32>
    %579 = arith.addf %578, %577 : vector<8x1xf32>
    %580 = math.log %579 : vector<8x1xf32>
    %581 = arith.addf %567, %580 : vector<8x1xf32>
    %c0_371 = arith.constant 0 : index
    %c0_372 = arith.constant 0 : index
    %582 = vector.load %arg6[%c0_371, %c0_372] : memref<8x1xf32, #tpu.memory_space<vmem>>, vector<8x1xf32>
    tpu.vector_store %arg6[%c0_371, %c0_372], %581 {strides = array<i32>} : memref<8x1xf32, #tpu.memory_space<vmem>>, vector<8x1xf32>,
    return
  }
  func.func @transform_0(%arg0: i32, %arg1: memref<8xi32, #tpu.memory_space<smem>>, %arg2: memref<8xi32, #tpu.memory_space<smem>>, %arg3: memref<40xi32, #tpu.memory_space<smem>>) -> (i32, i32) {
    %c0_i32 = arith.constant 0 : i32
    %c0_i32_0 = arith.constant 0 : i32
    %c0_i32_1 = arith.constant 0 : i32
    return %c0_i32, %c0_i32_0 : i32, i32
  }
  func.func @transform_1(%arg0: i32, %arg1: memref<8xi32, #tpu.memory_space<smem>>, %arg2: memref<8xi32, #tpu.memory_space<smem>>, %arg3: memref<40xi32, #tpu.memory_space<smem>>) -> (i32, i32) {
    %c0_i32 = arith.constant 0 : i32
    %c0_i32_0 = arith.constant 0 : i32
    %c0_i32_1 = arith.constant 0 : i32
    return %c0_i32, %c0_i32_0 : i32, i32
  }
  func.func @transform_2(%arg0: i32, %arg1: memref<8xi32, #tpu.memory_space<smem>>, %arg2: memref<8xi32, #tpu.memory_space<smem>>, %arg3: memref<40xi32, #tpu.memory_space<smem>>) -> (i32, i32) {
    %c0_i32 = arith.constant 0 : i32
    %c0_i32_0 = arith.constant 0 : i32
    return %arg0, %c0_i32 : i32, i32
  }
}

</mosaic_0001>

<llo_original>
// kernel: tpu_custom_call.1
$region0: #{tpu_custom_call.1}
  #allocation0 [shape = 'u32[]', space=smem, size = 0x4, offset = 0x4, fixed_abs, tag = 'smem constant byte address 0x4 - core index']
  #allocation1 [shape = 'u32[72,128]{1,0:T(1,128)}', space=vmem, size = 0x9000, scoped, tag = 'internal scratch']
  #allocation2 [shape = 'f32[8,32]{1,0:T(8,128)}', space=vmem, size = 0x1000, scoped, tag = 'scratch operand']
  #allocation3 [shape = 'f32[8,32]{1,0:T(8,128)}', space=vmem, size = 0x1000, scoped, tag = 'scratch operand']
  #allocation4 [shape = 'f32[5,8,32]{2,1,0:T(8,128)}', space=vmem, size = 0x5000, scoped, tag = 'scratch operand']
  #allocation5 [shape = 's32[1]{0}', space=sflag, size = 0x4, scoped, tag = 'scratch operand']
  #allocation6 [shape = 's32[1]{0}', space=sflag, size = 0x4, scoped, tag = 'scoped memory for tpu_custom_call.1']
  #allocation7 [shape = 'u8[512]{0}', space=smem, size = 0x200, scoped, tag = 'prefetched SMEM operand 0']
  #allocation8 [shape = 'u8[512]{0}', space=smem, size = 0x200, scoped, tag = 'prefetched SMEM operand 1']
  #allocation9 [shape = 'u8[512]{0}', space=smem, size = 0x200, scoped, tag = 'prefetched SMEM operand 2']
  %s0 = inlined_call_operand.vmem [shape: s32[8], index: 0, kind: input, shape index: {}]
  %s1 = inlined_call_operand.vmem [shape: s32[8], index: 1, kind: input, shape index: {}]
  %s2 = inlined_call_operand.vmem [shape: s32[40], index: 2, kind: input, shape index: {}]
  %s3 = inlined_call_operand.vmem [shape: f32[64,32], index: 3, kind: input, shape index: {}]
  %s4 = inlined_call_operand.vmem [shape: f32[64,32], index: 4, kind: input, shape index: {}]
  %s5 = inlined_call_operand.vmem [shape: f32[8,1], index: 5, kind: output, shape index: {}]
  %s6 = sld [smem:[#allocation0]]
  $region18: #{tpu_custom_call.1} parent=0
    _
  %s8 = ssub.s32 1, %s6
  %s9 = scalar_select 0, %s8, %s6
  %s11 = sshll.u32 %s0, 4
  %s12 = int_to_ptr.vmem [resolvable:$true] %s11
  %14 = dma.vmem_to_smem %s12, 16, [#allocation7], [#allocation6]
  %s16 = sshll.u32 %s1, 4
  %s17 = int_to_ptr.vmem [resolvable:$true] %s16
  %19 = dma.vmem_to_smem %s17, 16, [#allocation8], [#allocation6]
  %s21 = sshll.u32 %s2, 4
  %s22 = int_to_ptr.vmem [resolvable:$true] %s21
  %24 = dma.vmem_to_smem %s22, 16, [#allocation9], [#allocation6]
  %26 = dma.done [#allocation6], 48
  %27 = sfence
  // Predicated region
  $region2: #{tpu_custom_call.1} parent=0 // pred_check
    _
  $region3: #{tpu_custom_call.1} parent=0 // pred_check_branch
    %29 = sbr.rel (0) target = $region5
  $region4: #{tpu_custom_call.1} parent=0 // pred_region
    _
  $region5: #{tpu_custom_call.1} parent=0 // pred_fallthru
    _
  // Predicated region
  $region6: #{tpu_custom_call.1} parent=0 // pred_check
    _
  $region7: #{tpu_custom_call.1} parent=0 // pred_check_branch
    %31 = sbr.rel (0) target = $region9
  $region8: #{tpu_custom_call.1} parent=0 // pred_region
    _
  $region9: #{tpu_custom_call.1} parent=0 // pred_fallthru
    _
  %s32 = smul.u32 0, 8
  %s33 = sld [smem:[#allocation7 + %s32]]
  %s34 = sld [smem:[#allocation8 + %s32]]
  %s35 = scalar_lea.vmem %s3, %s33
  %v36 = vld [vmem:[%s35] sm:$0x1]
  %vm37 = vcmask 253952
  %38 = vst.msk [vmem:[#allocation2] sm:$0x1] %vm37, %v36
  %s39 = scalar_lea.vmem %s4, %s34
  %v40 = vld [vmem:[%s39] sm:$0x1]
  %41 = vst.msk [vmem:[#allocation3] sm:$0x1] %vm37, %v40
  %s42 = smul.u32 0, 40
  %s43 = sld [smem:[#allocation9 + %s42]]
  %s44 = scalar_lea.vmem %s4, %s43
  %v45 = vld [vmem:[%s44] sm:$0x1]
  %46 = vst.msk [vmem:[#allocation4] sm:$0x1] %vm37, %v45
  %s47 = sadd.s32 %s42, 1
  %s48 = sld [smem:[#allocation9 + %s47]]
  %s49 = scalar_lea.vmem %s4, %s48
  %v50 = vld [vmem:[%s49] sm:$0x1]
  %s51 = scalar_lea.vmem [#allocation4], 8
  %52 = vst.msk [vmem:[%s51] sm:$0x1] %vm37, %v50
  %s53 = sadd.s32 %s42, 2
  %s54 = sld [smem:[#allocation9 + %s53]]
  %s55 = scalar_lea.vmem %s4, %s54
  %v56 = vld [vmem:[%s55] sm:$0x1]
  %s57 = scalar_lea.vmem [#allocation4], 16
  %58 = vst.msk [vmem:[%s57] sm:$0x1] %vm37, %v56
  %s59 = sadd.s32 %s42, 3
  %s60 = sld [smem:[#allocation9 + %s59]]
  %s61 = scalar_lea.vmem %s4, %s60
  %v62 = vld [vmem:[%s61] sm:$0x1]
  %s63 = scalar_lea.vmem [#allocation4], 24
  %64 = vst.msk [vmem:[%s63] sm:$0x1] %vm37, %v62
  %s65 = sadd.s32 %s42, 4
  %s66 = sld [smem:[#allocation9 + %s65]]
  %s67 = scalar_lea.vmem %s4, %s66
  %v68 = vld [vmem:[%s67] sm:$0x1]
  %s69 = scalar_lea.vmem [#allocation4], 32
  %70 = vst.msk [vmem:[%s69] sm:$0x1] %vm37, %v68
  %s71 = sadd.s32 %s32, 1
  %s72 = sld [smem:[#allocation7 + %s71]]
  %s73 = sld [smem:[#allocation8 + %s71]]
  %s74 = scalar_lea.vmem %s3, %s72
  %v75 = vld [vmem:[%s74] sm:$0x1]
  %76 = vst.msk [vmem:[#allocation2 + $0x1] sm:$0x1] %vm37, %v75
  %s77 = scalar_lea.vmem %s4, %s73
  %v78 = vld [vmem:[%s77] sm:$0x1]
  %79 = vst.msk [vmem:[#allocation3 + $0x1] sm:$0x1] %vm37, %v78
  %s80 = smul.u32 %s71, 5
  %s81 = sld [smem:[#allocation9 + %s80]]
  %s82 = scalar_lea.vmem %s4, %s81
  %v83 = vld [vmem:[%s82] sm:$0x1]
  %84 = vst.msk [vmem:[#allocation4 + $0x1] sm:$0x1] %vm37, %v83
  %s85 = sadd.s32 %s80, 1
  %s86 = sld [smem:[#allocation9 + %s85]]
  %s87 = scalar_lea.vmem %s4, %s86
  %v88 = vld [vmem:[%s87] sm:$0x1]
  %89 = vst.msk [vmem:[%s51 + $0x1] sm:$0x1] %vm37, %v88
  %s90 = sadd.s32 %s80, 2
  %s91 = sld [smem:[#allocation9 + %s90]]
  %s92 = scalar_lea.vmem %s4, %s91
  %v93 = vld [vmem:[%s92] sm:$0x1]
  %94 = vst.msk [vmem:[%s57 + $0x1] sm:$0x1] %vm37, %v93
  %s95 = sadd.s32 %s80, 3
  %s96 = sld [smem:[#allocation9 + %s95]]
  %s97 = scalar_lea.vmem %s4, %s96
  %v98 = vld [vmem:[%s97] sm:$0x1]
  %99 = vst.msk [vmem:[%s63 + $0x1] sm:$0x1] %vm37, %v98
  %s100 = sadd.s32 %s80, 4
  %s101 = sld [smem:[#allocation9 + %s100]]
  %s102 = scalar_lea.vmem %s4, %s101
  %v103 = vld [vmem:[%s102] sm:$0x1]
  %104 = vst.msk [vmem:[%s69 + $0x1] sm:$0x1] %vm37, %v103
  %s105 = sadd.s32 %s32, 2
  %s106 = sld [smem:[#allocation7 + %s105]]
  %s107 = sld [smem:[#allocation8 + %s105]]
  %s108 = scalar_lea.vmem %s3, %s106
  %v109 = vld [vmem:[%s108] sm:$0x1]
  %110 = vst.msk [vmem:[#allocation2 + $0x2] sm:$0x1] %vm37, %v109
  %s111 = scalar_lea.vmem %s4, %s107
  %v112 = vld [vmem:[%s111] sm:$0x1]
  %113 = vst.msk [vmem:[#allocation3 + $0x2] sm:$0x1] %vm37, %v112
  %s114 = smul.u32 %s105, 5
  %s115 = sld [smem:[#allocation9 + %s114]]
  %s116 = scalar_lea.vmem %s4, %s115
  %v117 = vld [vmem:[%s116] sm:$0x1]
  %118 = vst.msk [vmem:[#allocation4 + $0x2] sm:$0x1] %vm37, %v117
  %s119 = sadd.s32 %s114, 1
  %s120 = sld [smem:[#allocation9 + %s119]]
  %s121 = scalar_lea.vmem %s4, %s120
  %v122 = vld [vmem:[%s121] sm:$0x1]
  %123 = vst.msk [vmem:[%s51 + $0x2] sm:$0x1] %vm37, %v122
  %s124 = sadd.s32 %s114, 2
  %s125 = sld [smem:[#allocation9 + %s124]]
  %s126 = scalar_lea.vmem %s4, %s125
  %v127 = vld [vmem:[%s126] sm:$0x1]
  %128 = vst.msk [vmem:[%s57 + $0x2] sm:$0x1] %vm37, %v127
  %s129 = sadd.s32 %s114, 3
  %s130 = sld [smem:[#allocation9 + %s129]]
  %s131 = scalar_lea.vmem %s4, %s130
  %v132 = vld [vmem:[%s131] sm:$0x1]
  %133 = vst.msk [vmem:[%s63 + $0x2] sm:$0x1] %vm37, %v132
  %s134 = sadd.s32 %s114, 4
  %s135 = sld [smem:[#allocation9 + %s134]]
  %s136 = scalar_lea.vmem %s4, %s135
  %v137 = vld [vmem:[%s136] sm:$0x1]
  %138 = vst.msk [vmem:[%s69 + $0x2] sm:$0x1] %vm37, %v137
  %s139 = sadd.s32 %s32, 3
  %s140 = sld [smem:[#allocation7 + %s139]]
  %s141 = sld [smem:[#allocation8 + %s139]]
  %s142 = scalar_lea.vmem %s3, %s140
  %v143 = vld [vmem:[%s142] sm:$0x1]
  %144 = vst.msk [vmem:[#allocation2 + $0x3] sm:$0x1] %vm37, %v143
  %s145 = scalar_lea.vmem %s4, %s141
  %v146 = vld [vmem:[%s145] sm:$0x1]
  %147 = vst.msk [vmem:[#allocation3 + $0x3] sm:$0x1] %vm37, %v146
  %s148 = smul.u32 %s139, 5
  %s149 = sld [smem:[#allocation9 + %s148]]
  %s150 = scalar_lea.vmem %s4, %s149
  %v151 = vld [vmem:[%s150] sm:$0x1]
  %152 = vst.msk [vmem:[#allocation4 + $0x3] sm:$0x1] %vm37, %v151
  %s153 = sadd.s32 %s148, 1
  %s154 = sld [smem:[#allocation9 + %s153]]
  %s155 = scalar_lea.vmem %s4, %s154
  %v156 = vld [vmem:[%s155] sm:$0x1]
  %157 = vst.msk [vmem:[%s51 + $0x3] sm:$0x1] %vm37, %v156
  %s158 = sadd.s32 %s148, 2
  %s159 = sld [smem:[#allocation9 + %s158]]
  %s160 = scalar_lea.vmem %s4, %s159
  %v161 = vld [vmem:[%s160] sm:$0x1]
  %162 = vst.msk [vmem:[%s57 + $0x3] sm:$0x1] %vm37, %v161
  %s163 = sadd.s32 %s148, 3
  %s164 = sld [smem:[#allocation9 + %s163]]
  %s165 = scalar_lea.vmem %s4, %s164
  %v166 = vld [vmem:[%s165] sm:$0x1]
  %167 = vst.msk [vmem:[%s63 + $0x3] sm:$0x1] %vm37, %v166
  %s168 = sadd.s32 %s148, 4
  %s169 = sld [smem:[#allocation9 + %s168]]
  %s170 = scalar_lea.vmem %s4, %s169
  %v171 = vld [vmem:[%s170] sm:$0x1]
  %172 = vst.msk [vmem:[%s69 + $0x3] sm:$0x1] %vm37, %v171
  %s173 = sadd.s32 %s32, 4
  %s174 = sld [smem:[#allocation7 + %s173]]
  %s175 = sld [smem:[#allocation8 + %s173]]
  %s176 = scalar_lea.vmem %s3, %s174
  %v177 = vld [vmem:[%s176] sm:$0x1]
  %178 = vst.msk [vmem:[#allocation2 + $0x4] sm:$0x1] %vm37, %v177
  %s179 = scalar_lea.vmem %s4, %s175
  %v180 = vld [vmem:[%s179] sm:$0x1]
  %181 = vst.msk [vmem:[#allocation3 + $0x4] sm:$0x1] %vm37, %v180
  %s182 = smul.u32 %s173, 5
  %s183 = sld [smem:[#allocation9 + %s182]]
  %s184 = scalar_lea.vmem %s4, %s183
  %v185 = vld [vmem:[%s184] sm:$0x1]
  %186 = vst.msk [vmem:[#allocation4 + $0x4] sm:$0x1] %vm37, %v185
  %s187 = sadd.s32 %s182, 1
  %s188 = sld [smem:[#allocation9 + %s187]]
  %s189 = scalar_lea.vmem %s4, %s188
  %v190 = vld [vmem:[%s189] sm:$0x1]
  %191 = vst.msk [vmem:[%s51 + $0x4] sm:$0x1] %vm37, %v190
  %s192 = sadd.s32 %s182, 2
  %s193 = sld [smem:[#allocation9 + %s192]]
  %s194 = scalar_lea.vmem %s4, %s193
  %v195 = vld [vmem:[%s194] sm:$0x1]
  %196 = vst.msk [vmem:[%s57 + $0x4] sm:$0x1] %vm37, %v195
  %s197 = sadd.s32 %s182, 3
  %s198 = sld [smem:[#allocation9 + %s197]]
  %s199 = scalar_lea.vmem %s4, %s198
  %v200 = vld [vmem:[%s199] sm:$0x1]
  %201 = vst.msk [vmem:[%s63 + $0x4] sm:$0x1] %vm37, %v200
  %s202 = sadd.s32 %s182, 4
  %s203 = sld [smem:[#allocation9 + %s202]]
  %s204 = scalar_lea.vmem %s4, %s203
  %v205 = vld [vmem:[%s204] sm:$0x1]
  %206 = vst.msk [vmem:[%s69 + $0x4] sm:$0x1] %vm37, %v205
  %s207 = sadd.s32 %s32, 5
  %s208 = sld [smem:[#allocation7 + %s207]]
  %s209 = sld [smem:[#allocation8 + %s207]]
  %s210 = scalar_lea.vmem %s3, %s208
  %v211 = vld [vmem:[%s210] sm:$0x1]
  %212 = vst.msk [vmem:[#allocation2 + $0x5] sm:$0x1] %vm37, %v211
  %s213 = scalar_lea.vmem %s4, %s209
  %v214 = vld [vmem:[%s213] sm:$0x1]
  %215 = vst.msk [vmem:[#allocation3 + $0x5] sm:$0x1] %vm37, %v214
  %s216 = smul.u32 %s207, 5
  %s217 = sld [smem:[#allocation9 + %s216]]
  %s218 = scalar_lea.vmem %s4, %s217
  %v219 = vld [vmem:[%s218] sm:$0x1]
  %220 = vst.msk [vmem:[#allocation4 + $0x5] sm:$0x1] %vm37, %v219
  %s221 = sadd.s32 %s216, 1
  %s222 = sld [smem:[#allocation9 + %s221]]
  %s223 = scalar_lea.vmem %s4, %s222
  %v224 = vld [vmem:[%s223] sm:$0x1]
  %225 = vst.msk [vmem:[%s51 + $0x5] sm:$0x1] %vm37, %v224
  %s226 = sadd.s32 %s216, 2
  %s227 = sld [smem:[#allocation9 + %s226]]
  %s228 = scalar_lea.vmem %s4, %s227
  %v229 = vld [vmem:[%s228] sm:$0x1]
  %230 = vst.msk [vmem:[%s57 + $0x5] sm:$0x1] %vm37, %v229
  %s231 = sadd.s32 %s216, 3
  %s232 = sld [smem:[#allocation9 + %s231]]
  %s233 = scalar_lea.vmem %s4, %s232
  %v234 = vld [vmem:[%s233] sm:$0x1]
  %235 = vst.msk [vmem:[%s63 + $0x5] sm:$0x1] %vm37, %v234
  %s236 = sadd.s32 %s216, 4
  %s237 = sld [smem:[#allocation9 + %s236]]
  %s238 = scalar_lea.vmem %s4, %s237
  %v239 = vld [vmem:[%s238] sm:$0x1]
  %240 = vst.msk [vmem:[%s69 + $0x5] sm:$0x1] %vm37, %v239
  %s241 = sadd.s32 %s32, 6
  %s242 = sld [smem:[#allocation7 + %s241]]
  %s243 = sld [smem:[#allocation8 + %s241]]
  %s244 = scalar_lea.vmem %s3, %s242
  %v245 = vld [vmem:[%s244] sm:$0x1]
  %246 = vst.msk [vmem:[#allocation2 + $0x6] sm:$0x1] %vm37, %v245
  %s247 = scalar_lea.vmem %s4, %s243
  %v248 = vld [vmem:[%s247] sm:$0x1]
  %249 = vst.msk [vmem:[#allocation3 + $0x6] sm:$0x1] %vm37, %v248
  %s250 = smul.u32 %s241, 5
  %s251 = sld [smem:[#allocation9 + %s250]]
  %s252 = scalar_lea.vmem %s4, %s251
  %v253 = vld [vmem:[%s252] sm:$0x1]
  %254 = vst.msk [vmem:[#allocation4 + $0x6] sm:$0x1] %vm37, %v253
  %s255 = sadd.s32 %s250, 1
  %s256 = sld [smem:[#allocation9 + %s255]]
  %s257 = scalar_lea.vmem %s4, %s256
  %v258 = vld [vmem:[%s257] sm:$0x1]
  %259 = vst.msk [vmem:[%s51 + $0x6] sm:$0x1] %vm37, %v258
  %s260 = sadd.s32 %s250, 2
  %s261 = sld [smem:[#allocation9 + %s260]]
  %s262 = scalar_lea.vmem %s4, %s261
  %v263 = vld [vmem:[%s262] sm:$0x1]
  %264 = vst.msk [vmem:[%s57 + $0x6] sm:$0x1] %vm37, %v263
  %s265 = sadd.s32 %s250, 3
  %s266 = sld [smem:[#allocation9 + %s265]]
  %s267 = scalar_lea.vmem %s4, %s266
  %v268 = vld [vmem:[%s267] sm:$0x1]
  %269 = vst.msk [vmem:[%s63 + $0x6] sm:$0x1] %vm37, %v268
  %s270 = sadd.s32 %s250, 4
  %s271 = sld [smem:[#allocation9 + %s270]]
  %s272 = scalar_lea.vmem %s4, %s271
  %v273 = vld [vmem:[%s272] sm:$0x1]
  %274 = vst.msk [vmem:[%s69 + $0x6] sm:$0x1] %vm37, %v273
  %s275 = sadd.s32 %s32, 7
  %s276 = sld [smem:[#allocation7 + %s275]]
  %s277 = sld [smem:[#allocation8 + %s275]]
  %s278 = scalar_lea.vmem %s3, %s276
  %v279 = vld [vmem:[%s278] sm:$0x1]
  %280 = vst.msk [vmem:[#allocation2 + $0x7] sm:$0x1] %vm37, %v279
  %s281 = scalar_lea.vmem %s4, %s277
  %v282 = vld [vmem:[%s281] sm:$0x1]
  %283 = vst.msk [vmem:[#allocation3 + $0x7] sm:$0x1] %vm37, %v282
  %s284 = smul.u32 %s275, 5
  %s285 = sld [smem:[#allocation9 + %s284]]
  %s286 = scalar_lea.vmem %s4, %s285
  %v287 = vld [vmem:[%s286] sm:$0x1]
  %288 = vst.msk [vmem:[#allocation4 + $0x7] sm:$0x1] %vm37, %v287
  %s289 = sadd.s32 %s284, 1
  %s290 = sld [smem:[#allocation9 + %s289]]
  %s291 = scalar_lea.vmem %s4, %s290
  %v292 = vld [vmem:[%s291] sm:$0x1]
  %293 = vst.msk [vmem:[%s51 + $0x7] sm:$0x1] %vm37, %v292
  %s294 = sadd.s32 %s284, 2
  %s295 = sld [smem:[#allocation9 + %s294]]
  %s296 = scalar_lea.vmem %s4, %s295
  %v297 = vld [vmem:[%s296] sm:$0x1]
  %298 = vst.msk [vmem:[%s57 + $0x7] sm:$0x1] %vm37, %v297
  %s299 = sadd.s32 %s284, 3
  %s300 = sld [smem:[#allocation9 + %s299]]
  %s301 = scalar_lea.vmem %s4, %s300
  %v302 = vld [vmem:[%s301] sm:$0x1]
  %303 = vst.msk [vmem:[%s63 + $0x7] sm:$0x1] %vm37, %v302
  %s304 = sadd.s32 %s284, 4
  %s305 = sld [smem:[#allocation9 + %s304]]
  %s306 = scalar_lea.vmem %s4, %s305
  %v307 = vld [vmem:[%s306] sm:$0x1]
  %308 = vst.msk [vmem:[%s69 + $0x7] sm:$0x1] %vm37, %v307
  %v309 = vld [vmem:[#allocation2] sm:$0xff]
  %v310 = vld [vmem:[#allocation3] sm:$0xff]
  %v311 = vmul.f32 %v309, %v310
  %vm312 = vcmask 261120
  %v313 = vsel %vm312, %v311, 0.0
  %314 = vadd.xlane.f32.xlu0 %v313
  %v315 = vpop.xlane.xlu0 %314
  %v316 = vmax.f32 %v315, -10.0
  %v317 = vmin.f32 %v316, 10.0
  %v318 = vsub.f32 0.0, %v317
  %v319 = vmul.f32 %v318, 1.442695
  %v320 = vpow.pop %v319
  %v321 = vadd.f32 %v320, 1.0
  %v322 = vlog2.pop %v321
  %v323 = vmul.f32 %v322, 0.6931472
  %v324 = vld [vmem:[#allocation4] sm:$0xff]
  %v325 = vmul.f32 %v324, %v309
  %v326 = vsel %vm312, %v325, 0.0
  %327 = vadd.xlane.f32.xlu0 %v326
  %v328 = vpop.xlane.xlu0 %327
  %v329 = vmax.f32 %v328, -10.0
  %v330 = vmin.f32 %v329, 10.0
  %v331 = vmul.f32 %v330, 1.442695
  %v332 = vpow.pop %v331
  %v333 = vadd.f32 %v332, 1.0
  %v334 = vlog2.pop %v333
  %v335 = vmul.f32 %v334, 0.6931472
  %v336 = vadd.f32 %v323, %v335
  %v337 = vld [vmem:[%s51] sm:$0xff]
  %v338 = vmul.f32 %v337, %v309
  %v339 = vsel %vm312, %v338, 0.0
  %340 = vadd.xlane.f32.xlu0 %v339
  %v341 = vpop.xlane.xlu0 %340
  %v342 = vmax.f32 %v341, -10.0
  %v343 = vmin.f32 %v342, 10.0
  %v344 = vmul.f32 %v343, 1.442695
  %v345 = vpow.pop %v344
  %v346 = vadd.f32 %v345, 1.0
  %v347 = vlog2.pop %v346
  %v348 = vmul.f32 %v347, 0.6931472
  %v349 = vadd.f32 %v336, %v348
  %v350 = vld [vmem:[%s57] sm:$0xff]
  %v351 = vmul.f32 %v350, %v309
  %v352 = vsel %vm312, %v351, 0.0
  %353 = vadd.xlane.f32.xlu0 %v352
  %v354 = vpop.xlane.xlu0 %353
  %v355 = vmax.f32 %v354, -10.0
  %v356 = vmin.f32 %v355, 10.0
  %v357 = vmul.f32 %v356, 1.442695
  %v358 = vpow.pop %v357
  %v359 = vadd.f32 %v358, 1.0
  %v360 = vlog2.pop %v359
  %v361 = vmul.f32 %v360, 0.6931472
  %v362 = vadd.f32 %v349, %v361
  %v363 = vld [vmem:[%s63] sm:$0xff]
  %v364 = vmul.f32 %v363, %v309
  %v365 = vsel %vm312, %v364, 0.0
  %366 = vadd.xlane.f32.xlu0 %v365
  %v367 = vpop.xlane.xlu0 %366
  %v368 = vmax.f32 %v367, -10.0
  %v369 = vmin.f32 %v368, 10.0
  %v370 = vmul.f32 %v369, 1.442695
  %v371 = vpow.pop %v370
  %v372 = vadd.f32 %v371, 1.0
  %v373 = vlog2.pop %v372
  %v374 = vmul.f32 %v373, 0.6931472
  %v375 = vadd.f32 %v362, %v374
  %v376 = vld [vmem:[%s69] sm:$0xff]
  %v377 = vmul.f32 %v376, %v309
  %v378 = vsel %vm312, %v377, 0.0
  %379 = vadd.xlane.f32.xlu0 %v378
  %v380 = vpop.xlane.xlu0 %379
  %v381 = vmax.f32 %v380, -10.0
  %v382 = vmin.f32 %v381, 10.0
  %v383 = vmul.f32 %v382, 1.442695
  %v384 = vpow.pop %v383
  %v385 = vadd.f32 %v384, 1.0
  %v386 = vlog2.pop %v385
  %v387 = vmul.f32 %v386, 0.6931472
  %v388 = vadd.f32 %v375, %v387
  %vm389 = vcmask 7168
  %390 = vst.msk [vmem:[%s5] sm:$0xff] %vm389, %v388
  // Predicated region
  $region10: #{tpu_custom_call.1} parent=0 // pred_check
    _
  $region11: #{tpu_custom_call.1} parent=0 // pred_check_branch
    %392 = sbr.rel (0) target = $region13
  $region12: #{tpu_custom_call.1} parent=0 // pred_region
    _
  $region13: #{tpu_custom_call.1} parent=0 // pred_fallthru
    _
  // Predicated region
  $region14: #{tpu_custom_call.1} parent=0 // pred_check
    _
  $region15: #{tpu_custom_call.1} parent=0 // pred_check_branch
    %394 = sbr.rel (0) target = $region17
  $region16: #{tpu_custom_call.1} parent=0 // pred_region
    _
  $region17: #{tpu_custom_call.1} parent=0 // pred_fallthru
    _
  %395 = vsyncmov [#allocation5]
  %s396 = vpop.sfrf %395
  %p397 = scmp.eq.s32.totalorder %s396, 0
  %p398 = pneg %p397
  %400 = shalt.err (%p398)

</llo_original>
